<compile_context>
chip_gen: v5e
topology: v5e:2x2
jax: 0.10.0
libtpu: 0.0.40
codegen_flags: <defaults>
</compile_context>

<pallas_src>
import jax
import jax.numpy as jnp
from jax.experimental import pallas as pl
from jax.experimental.pallas import tpu as pltpu


# ---------------------------------------------------------------------------
# Fused kernel: all LSTM layers + head in one VMEM-resident invocation.
# ---------------------------------------------------------------------------
def _make_fused_lstm_kernel(num_layers, seq_len, batch, hidden):
    S, B, H = seq_len, batch, hidden

    def kernel(*refs):
        x_ref = refs[0]                                     # (B, S, I) batch-first
        lstm_refs = refs[1:1 + 3 * num_layers]              # per layer: wih, whh, bias
        w1_ref, b1_ref, w2_ref, b2_ref = refs[1 + 3 * num_layers:5 + 3 * num_layers]
        out_ref = refs[5 + 3 * num_layers]                  # (L*B, C)

        # Build the time-major (S*B, I) view in-kernel (x is tiny & VMEM
        # resident) — no host-side XLA transpose / extra HBM pass.
        x = x_ref[...]                                      # (B, S, I)
        layer_in = jnp.concatenate([x[:, t, :] for t in range(S)], axis=0)  # (S*B, I)

        hn_parts = []
        for layer in range(num_layers):
            w_ih = lstm_refs[3 * layer][...]                # (in_features, 4H)
            w_hh = lstm_refs[3 * layer + 1][...]            # (H, 4H)
            bias = lstm_refs[3 * layer + 2][...]            # (1, 4H) = b_ih + b_hh

            # Hoisted input projection: ONE matmul covering every timestep, so
            # only h @ W_hh stays inside the serial recurrence.
            gx = jnp.dot(layer_in, w_ih,
                         preferred_element_type=jnp.float32) + bias   # (S*B, 4H)

            h = jnp.zeros((B, H), jnp.float32)
            c = jnp.zeros((B, H), jnp.float32)
            hs = []
            # Fully unrolled time loop; h/c are loop-carried values in vregs.
            for t in range(S):
                gates = gx[t * B:(t + 1) * B, :] + jnp.dot(
                    h, w_hh, preferred_element_type=jnp.float32)      # (B, 4H)
                i_g = jax.nn.sigmoid(gates[:, 0 * H:1 * H])
                f_g = jax.nn.sigmoid(gates[:, 1 * H:2 * H])
                g_g = jnp.tanh(gates[:, 2 * H:3 * H])
                o_g = jax.nn.sigmoid(gates[:, 3 * H:4 * H])
                c = f_g * c + i_g * g_g
                h = o_g * jnp.tanh(c)
                if layer < num_layers - 1:
                    hs.append(h)            # only needed as next layer's input
            hn_parts.append(h)              # final hidden state of this layer
            if layer < num_layers - 1:
                layer_in = jnp.concatenate(hs, axis=0)      # (S*B, H) time-major

        # hn.view(-1, H): layer-major stack of the final hidden states.
        hn = jnp.concatenate(hn_parts, axis=0)              # (L*B, H)

        # Fused head: relu -> fc_1 -> relu -> fin_fc, single output store.
        z = jnp.maximum(hn, 0.0)
        z = jnp.dot(z, w1_ref[...], preferred_element_type=jnp.float32) + b1_ref[...]
        z = jnp.maximum(z, 0.0)
        out_ref[...] = (
            jnp.dot(z, w2_ref[...], preferred_element_type=jnp.float32) + b2_ref[...]
        )

    return kernel


@jax.jit
def lstm_forward(params, x):
    """x: (batch, seq, input_size), batch_first like the PyTorch module."""
    B, S, _ = x.shape
    num_layers = len(params["lstm"])
    H = params["lstm"][0]["w_hh_t"].shape[0]
    C = params["w2_t"].shape[1]

    args = [x.astype(jnp.float32)]
    for lp in params["lstm"]:
        args.extend([lp["w_ih_t"], lp["w_hh_t"], lp["bias"]])
    args.extend([params["w1_t"], params["b1"], params["w2_t"], params["b2"]])

    kernel = _make_fused_lstm_kernel(num_layers, S, B, H)
    vmem_spec = pl.BlockSpec(memory_space=pltpu.MemorySpace.VMEM)
    return pl.pallas_call(
        kernel,
        out_shape=jax.ShapeDtypeStruct((num_layers * B, C), jnp.float32),
        in_specs=[vmem_spec] * len(args),
        out_specs=vmem_spec,
    )(*args)


# ---------------------------------------------------------------------------
# Parameter init (deterministic, PyTorch-default-style uniform ranges).
# ---------------------------------------------------------------------------
def init_params(key, num_cls, input_size, hidden_size, num_layers):
    params = {"lstm": []}
    k_lstm = 1.0 / jnp.sqrt(hidden_size)
    for layer in range(num_layers):
        in_sz = input_size if layer == 0 else hidden_size
        key, k1, k2, k3, k4 = jax.random.split(key, 5)
        w_ih = jax.random.uniform(k1, (4 * hidden_size, in_sz),
                                  minval=-k_lstm, maxval=k_lstm)
        w_hh = jax.random.uniform(k2, (4 * hidden_size, hidden_size),
                                  minval=-k_lstm, maxval=k_lstm)
        b_ih = jax.random.uniform(k3, (4 * hidden_size,),
                                  minval=-k_lstm, maxval=k_lstm)
        b_hh = jax.random.uniform(k4, (4 * hidden_size,),
                                  minval=-k_lstm, maxval=k_lstm)
        params["lstm"].append({
            "w_ih_t": jnp.asarray(w_ih.T, jnp.float32),                # (in, 4H)
            "w_hh_t": jnp.asarray(w_hh.T, jnp.float32),                # (H, 4H)
            "bias": jnp.asarray((b_ih + b_hh)[None, :], jnp.float32),  # (1, 4H)
        })

    key, k1, k2, k3, k4 = jax.random.split(key, 5)
    k_fc1 = 1.0 / jnp.sqrt(hidden_size)
    w1 = jax.random.uniform(k1, (128, hidden_size), minval=-k_fc1, maxval=k_fc1)
    b1 = jax.random.uniform(k2, (128,), minval=-k_fc1, maxval=k_fc1)
    k_fc2 = 1.0 / jnp.sqrt(128.0)
    w2 = jax.random.uniform(k3, (num_cls, 128), minval=-k_fc2, maxval=k_fc2)
    b2 = jax.random.uniform(k4, (num_cls,), minval=-k_fc2, maxval=k_fc2)
    params["w1_t"] = jnp.asarray(w1.T, jnp.float32)                    # (H, 128)
    params["b1"] = jnp.asarray(b1[None, :], jnp.float32)               # (1, 128)
    params["w2_t"] = jnp.asarray(w2.T, jnp.float32)                    # (128, C)
    params["b2"] = jnp.asarray(b2[None, :], jnp.float32)               # (1, C)
    return params


# ---------------------------------------------------------------------------
# Pure-JAX reference (same math, no Pallas) for a correctness check.
# ---------------------------------------------------------------------------
def _reference_forward(params, x):
    B = x.shape[0]
    layer_in = jnp.transpose(x, (1, 0, 2)).astype(jnp.float32)  # (S, B, I)
    hn_parts = []
    for lp in params["lstm"]:
        H = lp["w_hh_t"].shape[0]
        h = jnp.zeros((B, H), jnp.float32)
        c = jnp.zeros((B, H), jnp.float32)
        outs = []
        for t in range(layer_in.shape[0]):
            gates = layer_in[t] @ lp["w_ih_t"] + h @ lp["w_hh_t"] + lp["bias"]
            i_g = jax.nn.sigmoid(gates[:, 0 * H:1 * H])
            f_g = jax.nn.sigmoid(gates[:, 1 * H:2 * H])
            g_g = jnp.tanh(gates[:, 2 * H:3 * H])
            o_g = jax.nn.sigmoid(gates[:, 3 * H:4 * H])
            c = f_g * c + i_g * g_g
            h = o_g * jnp.tanh(c)
            outs.append(h)
        hn_parts.append(h)
        layer_in = jnp.stack(outs, axis=0)
    hn = jnp.concatenate(hn_parts, axis=0)
    z = jnp.maximum(hn, 0.0)
    z = jnp.maximum(z @ params["w1_t"] + params["b1"], 0.0)
    return z @ params["w2_t"] + params["b2"]


if __name__ == "__main__":
    num_cls = 5
    input_size = 8
    hidden_size = 32
    num_layers = 2
    seq_length = 8
    batch = 2

    key = jax.random.PRNGKey(0)
    key, xk = jax.random.split(key)
    x = jax.random.normal(xk, (batch, seq_length, input_size), dtype=jnp.float32)

    params = init_params(key, num_cls, input_size, hidden_size, num_layers)

    out = lstm_forward(params, x)
    out = jax.block_until_ready(out)
    assert out.shape == (num_layers * batch, num_cls), out.shape

    ref = _reference_forward(params, x)
    assert jnp.allclose(out, ref, rtol=1e-3, atol=1e-3), (
        float(jnp.max(jnp.abs(out - ref))))

    print("KERNEL_OK")
</pallas_src>

<mosaic_0001>
module attributes {stable_mosaic.version = 11 : i64} {
  func.func @kernel(%arg0: memref<2x8x8xf32, #tpu.memory_space<vmem>>, %arg1: memref<8x128xf32, #tpu.memory_space<vmem>>, %arg2: memref<32x128xf32, #tpu.memory_space<vmem>>, %arg3: memref<1x128xf32, #tpu.memory_space<vmem>>, %arg4: memref<32x128xf32, #tpu.memory_space<vmem>>, %arg5: memref<32x128xf32, #tpu.memory_space<vmem>>, %arg6: memref<1x128xf32, #tpu.memory_space<vmem>>, %arg7: memref<32x128xf32, #tpu.memory_space<vmem>>, %arg8: memref<1x128xf32, #tpu.memory_space<vmem>>, %arg9: memref<128x5xf32, #tpu.memory_space<vmem>>, %arg10: memref<1x5xf32, #tpu.memory_space<vmem>>, %arg11: memref<4x5xf32, #tpu.memory_space<vmem>>) attributes {dimension_semantics = [], scalar_prefetch = 0 : i64, scratch_operands = 0 : i64, tpu.core_type = #tpu.core_type<tc>} {
    %c0 = arith.constant 0 : index
    %c0_0 = arith.constant 0 : index
    %c0_1 = arith.constant 0 : index
    %0 = vector.load %arg0[%c0, %c0_0, %c0_1] : memref<2x8x8xf32, #tpu.memory_space<vmem>>, vector<2x8x8xf32>
    %1 = vector.extract_strided_slice %0 {offsets = [0, 0, 0], sizes = [2, 1, 8], strides = [1, 1, 1]} : vector<2x8x8xf32> to vector<2x1x8xf32>
    %2 = vector.shape_cast %1 : vector<2x1x8xf32> to vector<2x8xf32>
    %3 = vector.extract_strided_slice %0 {offsets = [0, 1, 0], sizes = [2, 1, 8], strides = [1, 1, 1]} : vector<2x8x8xf32> to vector<2x1x8xf32>
    %4 = vector.shape_cast %3 : vector<2x1x8xf32> to vector<2x8xf32>
    %5 = vector.extract_strided_slice %0 {offsets = [0, 2, 0], sizes = [2, 1, 8], strides = [1, 1, 1]} : vector<2x8x8xf32> to vector<2x1x8xf32>
    %6 = vector.shape_cast %5 : vector<2x1x8xf32> to vector<2x8xf32>
    %7 = vector.extract_strided_slice %0 {offsets = [0, 3, 0], sizes = [2, 1, 8], strides = [1, 1, 1]} : vector<2x8x8xf32> to vector<2x1x8xf32>
    %8 = vector.shape_cast %7 : vector<2x1x8xf32> to vector<2x8xf32>
    %9 = vector.extract_strided_slice %0 {offsets = [0, 4, 0], sizes = [2, 1, 8], strides = [1, 1, 1]} : vector<2x8x8xf32> to vector<2x1x8xf32>
    %10 = vector.shape_cast %9 : vector<2x1x8xf32> to vector<2x8xf32>
    %11 = vector.extract_strided_slice %0 {offsets = [0, 5, 0], sizes = [2, 1, 8], strides = [1, 1, 1]} : vector<2x8x8xf32> to vector<2x1x8xf32>
    %12 = vector.shape_cast %11 : vector<2x1x8xf32> to vector<2x8xf32>
    %13 = vector.extract_strided_slice %0 {offsets = [0, 6, 0], sizes = [2, 1, 8], strides = [1, 1, 1]} : vector<2x8x8xf32> to vector<2x1x8xf32>
    %14 = vector.shape_cast %13 : vector<2x1x8xf32> to vector<2x8xf32>
    %15 = vector.extract_strided_slice %0 {offsets = [0, 7, 0], sizes = [2, 1, 8], strides = [1, 1, 1]} : vector<2x8x8xf32> to vector<2x1x8xf32>
    %16 = vector.shape_cast %15 : vector<2x1x8xf32> to vector<2x8xf32>
    %17 = tpu.concatenate %2, %4, %6, %8, %10, %12, %14, %16 in 0 : vector<2x8xf32>, vector<2x8xf32>, vector<2x8xf32>, vector<2x8xf32>, vector<2x8xf32>, vector<2x8xf32>, vector<2x8xf32>, vector<2x8xf32> -> vector<16x8xf32>
    %c0_2 = arith.constant 0 : index
    %c0_3 = arith.constant 0 : index
    %18 = vector.load %arg1[%c0_2, %c0_3] : memref<8x128xf32, #tpu.memory_space<vmem>>, vector<8x128xf32>
    %c0_4 = arith.constant 0 : index
    %c0_5 = arith.constant 0 : index
    %19 = vector.load %arg2[%c0_4, %c0_5] : memref<32x128xf32, #tpu.memory_space<vmem>>, vector<32x128xf32>
    %c0_6 = arith.constant 0 : index
    %c0_7 = arith.constant 0 : index
    %20 = vector.load %arg3[%c0_6, %c0_7] : memref<1x128xf32, #tpu.memory_space<vmem>>, vector<1x128xf32>
    %cst = arith.constant dense<0.000000e+00> : vector<16x128xf32>
    %21 = tpu.matmul %17, %18, %cst {dimension_numbers = #tpu.dot_dimension_numbers<[1], [0], [0], [1], [0, 0, 1, 1], [], []>} : vector<16x8xf32>, vector<8x128xf32>, vector<16x128xf32> -> vector<16x128xf32>
    %22 = vector.broadcast %20 : vector<1x128xf32> to vector<16x128xf32>
    %23 = arith.addf %21, %22 : vector<16x128xf32>
    %cst_8 = arith.constant 0.000000e+00 : f32
    %24 = vector.broadcast %cst_8 : f32 to vector<2x32xf32>
    %cst_9 = arith.constant 0.000000e+00 : f32
    %25 = vector.broadcast %cst_9 : f32 to vector<2x32xf32>
    %26 = vector.extract_strided_slice %23 {offsets = [0, 0], sizes = [2, 128], strides = [1, 1]} : vector<16x128xf32> to vector<2x128xf32>
    %cst_10 = arith.constant dense<0.000000e+00> : vector<2x128xf32>
    %27 = tpu.matmul %24, %19, %cst_10 {dimension_numbers = #tpu.dot_dimension_numbers<[1], [0], [0], [1], [0, 0, 1, 1], [], []>} : vector<2x32xf32>, vector<32x128xf32>, vector<2x128xf32> -> vector<2x128xf32>
    %28 = arith.addf %26, %27 : vector<2x128xf32>
    %29 = vector.extract_strided_slice %28 {offsets = [0, 0], sizes = [2, 32], strides = [1, 1]} : vector<2x128xf32> to vector<2x32xf32>
    %30 = arith.negf %29 : vector<2x32xf32>
    %31 = math.exp %30 : vector<2x32xf32>
    %cst_11 = arith.constant 1.000000e+00 : f32
    %32 = vector.broadcast %cst_11 : f32 to vector<2x32xf32>
    %33 = arith.addf %32, %31 : vector<2x32xf32>
    %34 = arith.divf %32, %33 : vector<2x32xf32>
    %35 = vector.extract_strided_slice %28 {offsets = [0, 32], sizes = [2, 32], strides = [1, 1]} : vector<2x128xf32> to vector<2x32xf32>
    %36 = arith.negf %35 : vector<2x32xf32>
    %37 = math.exp %36 : vector<2x32xf32>
    %cst_12 = arith.constant 1.000000e+00 : f32
    %38 = vector.broadcast %cst_12 : f32 to vector<2x32xf32>
    %39 = arith.addf %38, %37 : vector<2x32xf32>
    %40 = arith.divf %38, %39 : vector<2x32xf32>
    %41 = vector.extract_strided_slice %28 {offsets = [0, 64], sizes = [2, 32], strides = [1, 1]} : vector<2x128xf32> to vector<2x32xf32>
    %42 = math.tanh %41 : vector<2x32xf32>
    %43 = vector.extract_strided_slice %28 {offsets = [0, 96], sizes = [2, 32], strides = [1, 1]} : vector<2x128xf32> to vector<2x32xf32>
    %44 = arith.negf %43 : vector<2x32xf32>
    %45 = math.exp %44 : vector<2x32xf32>
    %cst_13 = arith.constant 1.000000e+00 : f32
    %46 = vector.broadcast %cst_13 : f32 to vector<2x32xf32>
    %47 = arith.addf %46, %45 : vector<2x32xf32>
    %48 = arith.divf %46, %47 : vector<2x32xf32>
    %49 = arith.mulf %40, %25 : vector<2x32xf32>
    %50 = arith.mulf %34, %42 : vector<2x32xf32>
    %51 = arith.addf %49, %50 : vector<2x32xf32>
    %52 = math.tanh %51 : vector<2x32xf32>
    %53 = arith.mulf %48, %52 : vector<2x32xf32>
    %54 = vector.extract_strided_slice %23 {offsets = [2, 0], sizes = [2, 128], strides = [1, 1]} : vector<16x128xf32> to vector<2x128xf32>
    %cst_14 = arith.constant dense<0.000000e+00> : vector<2x128xf32>
    %55 = tpu.matmul %53, %19, %cst_14 {dimension_numbers = #tpu.dot_dimension_numbers<[1], [0], [0], [1], [0, 0, 1, 1], [], []>} : vector<2x32xf32>, vector<32x128xf32>, vector<2x128xf32> -> vector<2x128xf32>
    %56 = arith.addf %54, %55 : vector<2x128xf32>
    %57 = vector.extract_strided_slice %56 {offsets = [0, 0], sizes = [2, 32], strides = [1, 1]} : vector<2x128xf32> to vector<2x32xf32>
    %58 = arith.negf %57 : vector<2x32xf32>
    %59 = math.exp %58 : vector<2x32xf32>
    %cst_15 = arith.constant 1.000000e+00 : f32
    %60 = vector.broadcast %cst_15 : f32 to vector<2x32xf32>
    %61 = arith.addf %60, %59 : vector<2x32xf32>
    %62 = arith.divf %60, %61 : vector<2x32xf32>
    %63 = vector.extract_strided_slice %56 {offsets = [0, 32], sizes = [2, 32], strides = [1, 1]} : vector<2x128xf32> to vector<2x32xf32>
    %64 = arith.negf %63 : vector<2x32xf32>
    %65 = math.exp %64 : vector<2x32xf32>
    %cst_16 = arith.constant 1.000000e+00 : f32
    %66 = vector.broadcast %cst_16 : f32 to vector<2x32xf32>
    %67 = arith.addf %66, %65 : vector<2x32xf32>
    %68 = arith.divf %66, %67 : vector<2x32xf32>
    %69 = vector.extract_strided_slice %56 {offsets = [0, 64], sizes = [2, 32], strides = [1, 1]} : vector<2x128xf32> to vector<2x32xf32>
    %70 = math.tanh %69 : vector<2x32xf32>
    %71 = vector.extract_strided_slice %56 {offsets = [0, 96], sizes = [2, 32], strides = [1, 1]} : vector<2x128xf32> to vector<2x32xf32>
    %72 = arith.negf %71 : vector<2x32xf32>
    %73 = math.exp %72 : vector<2x32xf32>
    %cst_17 = arith.constant 1.000000e+00 : f32
    %74 = vector.broadcast %cst_17 : f32 to vector<2x32xf32>
    %75 = arith.addf %74, %73 : vector<2x32xf32>
    %76 = arith.divf %74, %75 : vector<2x32xf32>
    %77 = arith.mulf %68, %51 : vector<2x32xf32>
    %78 = arith.mulf %62, %70 : vector<2x32xf32>
    %79 = arith.addf %77, %78 : vector<2x32xf32>
    %80 = math.tanh %79 : vector<2x32xf32>
    %81 = arith.mulf %76, %80 : vector<2x32xf32>
    %82 = vector.extract_strided_slice %23 {offsets = [4, 0], sizes = [2, 128], strides = [1, 1]} : vector<16x128xf32> to vector<2x128xf32>
    %cst_18 = arith.constant dense<0.000000e+00> : vector<2x128xf32>
    %83 = tpu.matmul %81, %19, %cst_18 {dimension_numbers = #tpu.dot_dimension_numbers<[1], [0], [0], [1], [0, 0, 1, 1], [], []>} : vector<2x32xf32>, vector<32x128xf32>, vector<2x128xf32> -> vector<2x128xf32>
    %84 = arith.addf %82, %83 : vector<2x128xf32>
    %85 = vector.extract_strided_slice %84 {offsets = [0, 0], sizes = [2, 32], strides = [1, 1]} : vector<2x128xf32> to vector<2x32xf32>
    %86 = arith.negf %85 : vector<2x32xf32>
    %87 = math.exp %86 : vector<2x32xf32>
    %cst_19 = arith.constant 1.000000e+00 : f32
    %88 = vector.broadcast %cst_19 : f32 to vector<2x32xf32>
    %89 = arith.addf %88, %87 : vector<2x32xf32>
    %90 = arith.divf %88, %89 : vector<2x32xf32>
    %91 = vector.extract_strided_slice %84 {offsets = [0, 32], sizes = [2, 32], strides = [1, 1]} : vector<2x128xf32> to vector<2x32xf32>
    %92 = arith.negf %91 : vector<2x32xf32>
    %93 = math.exp %92 : vector<2x32xf32>
    %cst_20 = arith.constant 1.000000e+00 : f32
    %94 = vector.broadcast %cst_20 : f32 to vector<2x32xf32>
    %95 = arith.addf %94, %93 : vector<2x32xf32>
    %96 = arith.divf %94, %95 : vector<2x32xf32>
    %97 = vector.extract_strided_slice %84 {offsets = [0, 64], sizes = [2, 32], strides = [1, 1]} : vector<2x128xf32> to vector<2x32xf32>
    %98 = math.tanh %97 : vector<2x32xf32>
    %99 = vector.extract_strided_slice %84 {offsets = [0, 96], sizes = [2, 32], strides = [1, 1]} : vector<2x128xf32> to vector<2x32xf32>
    %100 = arith.negf %99 : vector<2x32xf32>
    %101 = math.exp %100 : vector<2x32xf32>
    %cst_21 = arith.constant 1.000000e+00 : f32
    %102 = vector.broadcast %cst_21 : f32 to vector<2x32xf32>
    %103 = arith.addf %102, %101 : vector<2x32xf32>
    %104 = arith.divf %102, %103 : vector<2x32xf32>
    %105 = arith.mulf %96, %79 : vector<2x32xf32>
    %106 = arith.mulf %90, %98 : vector<2x32xf32>
    %107 = arith.addf %105, %106 : vector<2x32xf32>
    %108 = math.tanh %107 : vector<2x32xf32>
    %109 = arith.mulf %104, %108 : vector<2x32xf32>
    %110 = vector.extract_strided_slice %23 {offsets = [6, 0], sizes = [2, 128], strides = [1, 1]} : vector<16x128xf32> to vector<2x128xf32>
    %cst_22 = arith.constant dense<0.000000e+00> : vector<2x128xf32>
    %111 = tpu.matmul %109, %19, %cst_22 {dimension_numbers = #tpu.dot_dimension_numbers<[1], [0], [0], [1], [0, 0, 1, 1], [], []>} : vector<2x32xf32>, vector<32x128xf32>, vector<2x128xf32> -> vector<2x128xf32>
    %112 = arith.addf %110, %111 : vector<2x128xf32>
    %113 = vector.extract_strided_slice %112 {offsets = [0, 0], sizes = [2, 32], strides = [1, 1]} : vector<2x128xf32> to vector<2x32xf32>
    %114 = arith.negf %113 : vector<2x32xf32>
    %115 = math.exp %114 : vector<2x32xf32>
    %cst_23 = arith.constant 1.000000e+00 : f32
    %116 = vector.broadcast %cst_23 : f32 to vector<2x32xf32>
    %117 = arith.addf %116, %115 : vector<2x32xf32>
    %118 = arith.divf %116, %117 : vector<2x32xf32>
    %119 = vector.extract_strided_slice %112 {offsets = [0, 32], sizes = [2, 32], strides = [1, 1]} : vector<2x128xf32> to vector<2x32xf32>
    %120 = arith.negf %119 : vector<2x32xf32>
    %121 = math.exp %120 : vector<2x32xf32>
    %cst_24 = arith.constant 1.000000e+00 : f32
    %122 = vector.broadcast %cst_24 : f32 to vector<2x32xf32>
    %123 = arith.addf %122, %121 : vector<2x32xf32>
    %124 = arith.divf %122, %123 : vector<2x32xf32>
    %125 = vector.extract_strided_slice %112 {offsets = [0, 64], sizes = [2, 32], strides = [1, 1]} : vector<2x128xf32> to vector<2x32xf32>
    %126 = math.tanh %125 : vector<2x32xf32>
    %127 = vector.extract_strided_slice %112 {offsets = [0, 96], sizes = [2, 32], strides = [1, 1]} : vector<2x128xf32> to vector<2x32xf32>
    %128 = arith.negf %127 : vector<2x32xf32>
    %129 = math.exp %128 : vector<2x32xf32>
    %cst_25 = arith.constant 1.000000e+00 : f32
    %130 = vector.broadcast %cst_25 : f32 to vector<2x32xf32>
    %131 = arith.addf %130, %129 : vector<2x32xf32>
    %132 = arith.divf %130, %131 : vector<2x32xf32>
    %133 = arith.mulf %124, %107 : vector<2x32xf32>
    %134 = arith.mulf %118, %126 : vector<2x32xf32>
    %135 = arith.addf %133, %134 : vector<2x32xf32>
    %136 = math.tanh %135 : vector<2x32xf32>
    %137 = arith.mulf %132, %136 : vector<2x32xf32>
    %138 = vector.extract_strided_slice %23 {offsets = [8, 0], sizes = [2, 128], strides = [1, 1]} : vector<16x128xf32> to vector<2x128xf32>
    %cst_26 = arith.constant dense<0.000000e+00> : vector<2x128xf32>
    %139 = tpu.matmul %137, %19, %cst_26 {dimension_numbers = #tpu.dot_dimension_numbers<[1], [0], [0], [1], [0, 0, 1, 1], [], []>} : vector<2x32xf32>, vector<32x128xf32>, vector<2x128xf32> -> vector<2x128xf32>
    %140 = arith.addf %138, %139 : vector<2x128xf32>
    %141 = vector.extract_strided_slice %140 {offsets = [0, 0], sizes = [2, 32], strides = [1, 1]} : vector<2x128xf32> to vector<2x32xf32>
    %142 = arith.negf %141 : vector<2x32xf32>
    %143 = math.exp %142 : vector<2x32xf32>
    %cst_27 = arith.constant 1.000000e+00 : f32
    %144 = vector.broadcast %cst_27 : f32 to vector<2x32xf32>
    %145 = arith.addf %144, %143 : vector<2x32xf32>
    %146 = arith.divf %144, %145 : vector<2x32xf32>
    %147 = vector.extract_strided_slice %140 {offsets = [0, 32], sizes = [2, 32], strides = [1, 1]} : vector<2x128xf32> to vector<2x32xf32>
    %148 = arith.negf %147 : vector<2x32xf32>
    %149 = math.exp %148 : vector<2x32xf32>
    %cst_28 = arith.constant 1.000000e+00 : f32
    %150 = vector.broadcast %cst_28 : f32 to vector<2x32xf32>
    %151 = arith.addf %150, %149 : vector<2x32xf32>
    %152 = arith.divf %150, %151 : vector<2x32xf32>
    %153 = vector.extract_strided_slice %140 {offsets = [0, 64], sizes = [2, 32], strides = [1, 1]} : vector<2x128xf32> to vector<2x32xf32>
    %154 = math.tanh %153 : vector<2x32xf32>
    %155 = vector.extract_strided_slice %140 {offsets = [0, 96], sizes = [2, 32], strides = [1, 1]} : vector<2x128xf32> to vector<2x32xf32>
    %156 = arith.negf %155 : vector<2x32xf32>
    %157 = math.exp %156 : vector<2x32xf32>
    %cst_29 = arith.constant 1.000000e+00 : f32
    %158 = vector.broadcast %cst_29 : f32 to vector<2x32xf32>
    %159 = arith.addf %158, %157 : vector<2x32xf32>
    %160 = arith.divf %158, %159 : vector<2x32xf32>
    %161 = arith.mulf %152, %135 : vector<2x32xf32>
    %162 = arith.mulf %146, %154 : vector<2x32xf32>
    %163 = arith.addf %161, %162 : vector<2x32xf32>
    %164 = math.tanh %163 : vector<2x32xf32>
    %165 = arith.mulf %160, %164 : vector<2x32xf32>
    %166 = vector.extract_strided_slice %23 {offsets = [10, 0], sizes = [2, 128], strides = [1, 1]} : vector<16x128xf32> to vector<2x128xf32>
    %cst_30 = arith.constant dense<0.000000e+00> : vector<2x128xf32>
    %167 = tpu.matmul %165, %19, %cst_30 {dimension_numbers = #tpu.dot_dimension_numbers<[1], [0], [0], [1], [0, 0, 1, 1], [], []>} : vector<2x32xf32>, vector<32x128xf32>, vector<2x128xf32> -> vector<2x128xf32>
    %168 = arith.addf %166, %167 : vector<2x128xf32>
    %169 = vector.extract_strided_slice %168 {offsets = [0, 0], sizes = [2, 32], strides = [1, 1]} : vector<2x128xf32> to vector<2x32xf32>
    %170 = arith.negf %169 : vector<2x32xf32>
    %171 = math.exp %170 : vector<2x32xf32>
    %cst_31 = arith.constant 1.000000e+00 : f32
    %172 = vector.broadcast %cst_31 : f32 to vector<2x32xf32>
    %173 = arith.addf %172, %171 : vector<2x32xf32>
    %174 = arith.divf %172, %173 : vector<2x32xf32>
    %175 = vector.extract_strided_slice %168 {offsets = [0, 32], sizes = [2, 32], strides = [1, 1]} : vector<2x128xf32> to vector<2x32xf32>
    %176 = arith.negf %175 : vector<2x32xf32>
    %177 = math.exp %176 : vector<2x32xf32>
    %cst_32 = arith.constant 1.000000e+00 : f32
    %178 = vector.broadcast %cst_32 : f32 to vector<2x32xf32>
    %179 = arith.addf %178, %177 : vector<2x32xf32>
    %180 = arith.divf %178, %179 : vector<2x32xf32>
    %181 = vector.extract_strided_slice %168 {offsets = [0, 64], sizes = [2, 32], strides = [1, 1]} : vector<2x128xf32> to vector<2x32xf32>
    %182 = math.tanh %181 : vector<2x32xf32>
    %183 = vector.extract_strided_slice %168 {offsets = [0, 96], sizes = [2, 32], strides = [1, 1]} : vector<2x128xf32> to vector<2x32xf32>
    %184 = arith.negf %183 : vector<2x32xf32>
    %185 = math.exp %184 : vector<2x32xf32>
    %cst_33 = arith.constant 1.000000e+00 : f32
    %186 = vector.broadcast %cst_33 : f32 to vector<2x32xf32>
    %187 = arith.addf %186, %185 : vector<2x32xf32>
    %188 = arith.divf %186, %187 : vector<2x32xf32>
    %189 = arith.mulf %180, %163 : vector<2x32xf32>
    %190 = arith.mulf %174, %182 : vector<2x32xf32>
    %191 = arith.addf %189, %190 : vector<2x32xf32>
    %192 = math.tanh %191 : vector<2x32xf32>
    %193 = arith.mulf %188, %192 : vector<2x32xf32>
    %194 = vector.extract_strided_slice %23 {offsets = [12, 0], sizes = [2, 128], strides = [1, 1]} : vector<16x128xf32> to vector<2x128xf32>
    %cst_34 = arith.constant dense<0.000000e+00> : vector<2x128xf32>
    %195 = tpu.matmul %193, %19, %cst_34 {dimension_numbers = #tpu.dot_dimension_numbers<[1], [0], [0], [1], [0, 0, 1, 1], [], []>} : vector<2x32xf32>, vector<32x128xf32>, vector<2x128xf32> -> vector<2x128xf32>
    %196 = arith.addf %194, %195 : vector<2x128xf32>
    %197 = vector.extract_strided_slice %196 {offsets = [0, 0], sizes = [2, 32], strides = [1, 1]} : vector<2x128xf32> to vector<2x32xf32>
    %198 = arith.negf %197 : vector<2x32xf32>
    %199 = math.exp %198 : vector<2x32xf32>
    %cst_35 = arith.constant 1.000000e+00 : f32
    %200 = vector.broadcast %cst_35 : f32 to vector<2x32xf32>
    %201 = arith.addf %200, %199 : vector<2x32xf32>
    %202 = arith.divf %200, %201 : vector<2x32xf32>
    %203 = vector.extract_strided_slice %196 {offsets = [0, 32], sizes = [2, 32], strides = [1, 1]} : vector<2x128xf32> to vector<2x32xf32>
    %204 = arith.negf %203 : vector<2x32xf32>
    %205 = math.exp %204 : vector<2x32xf32>
    %cst_36 = arith.constant 1.000000e+00 : f32
    %206 = vector.broadcast %cst_36 : f32 to vector<2x32xf32>
    %207 = arith.addf %206, %205 : vector<2x32xf32>
    %208 = arith.divf %206, %207 : vector<2x32xf32>
    %209 = vector.extract_strided_slice %196 {offsets = [0, 64], sizes = [2, 32], strides = [1, 1]} : vector<2x128xf32> to vector<2x32xf32>
    %210 = math.tanh %209 : vector<2x32xf32>
    %211 = vector.extract_strided_slice %196 {offsets = [0, 96], sizes = [2, 32], strides = [1, 1]} : vector<2x128xf32> to vector<2x32xf32>
    %212 = arith.negf %211 : vector<2x32xf32>
    %213 = math.exp %212 : vector<2x32xf32>
    %cst_37 = arith.constant 1.000000e+00 : f32
    %214 = vector.broadcast %cst_37 : f32 to vector<2x32xf32>
    %215 = arith.addf %214, %213 : vector<2x32xf32>
    %216 = arith.divf %214, %215 : vector<2x32xf32>
    %217 = arith.mulf %208, %191 : vector<2x32xf32>
    %218 = arith.mulf %202, %210 : vector<2x32xf32>
    %219 = arith.addf %217, %218 : vector<2x32xf32>
    %220 = math.tanh %219 : vector<2x32xf32>
    %221 = arith.mulf %216, %220 : vector<2x32xf32>
    %222 = vector.extract_strided_slice %23 {offsets = [14, 0], sizes = [2, 128], strides = [1, 1]} : vector<16x128xf32> to vector<2x128xf32>
    %cst_38 = arith.constant dense<0.000000e+00> : vector<2x128xf32>
    %223 = tpu.matmul %221, %19, %cst_38 {dimension_numbers = #tpu.dot_dimension_numbers<[1], [0], [0], [1], [0, 0, 1, 1], [], []>} : vector<2x32xf32>, vector<32x128xf32>, vector<2x128xf32> -> vector<2x128xf32>
    %224 = arith.addf %222, %223 : vector<2x128xf32>
    %225 = vector.extract_strided_slice %224 {offsets = [0, 0], sizes = [2, 32], strides = [1, 1]} : vector<2x128xf32> to vector<2x32xf32>
    %226 = arith.negf %225 : vector<2x32xf32>
    %227 = math.exp %226 : vector<2x32xf32>
    %cst_39 = arith.constant 1.000000e+00 : f32
    %228 = vector.broadcast %cst_39 : f32 to vector<2x32xf32>
    %229 = arith.addf %228, %227 : vector<2x32xf32>
    %230 = arith.divf %228, %229 : vector<2x32xf32>
    %231 = vector.extract_strided_slice %224 {offsets = [0, 32], sizes = [2, 32], strides = [1, 1]} : vector<2x128xf32> to vector<2x32xf32>
    %232 = arith.negf %231 : vector<2x32xf32>
    %233 = math.exp %232 : vector<2x32xf32>
    %cst_40 = arith.constant 1.000000e+00 : f32
    %234 = vector.broadcast %cst_40 : f32 to vector<2x32xf32>
    %235 = arith.addf %234, %233 : vector<2x32xf32>
    %236 = arith.divf %234, %235 : vector<2x32xf32>
    %237 = vector.extract_strided_slice %224 {offsets = [0, 64], sizes = [2, 32], strides = [1, 1]} : vector<2x128xf32> to vector<2x32xf32>
    %238 = math.tanh %237 : vector<2x32xf32>
    %239 = vector.extract_strided_slice %224 {offsets = [0, 96], sizes = [2, 32], strides = [1, 1]} : vector<2x128xf32> to vector<2x32xf32>
    %240 = arith.negf %239 : vector<2x32xf32>
    %241 = math.exp %240 : vector<2x32xf32>
    %cst_41 = arith.constant 1.000000e+00 : f32
    %242 = vector.broadcast %cst_41 : f32 to vector<2x32xf32>
    %243 = arith.addf %242, %241 : vector<2x32xf32>
    %244 = arith.divf %242, %243 : vector<2x32xf32>
    %245 = arith.mulf %236, %219 : vector<2x32xf32>
    %246 = arith.mulf %230, %238 : vector<2x32xf32>
    %247 = arith.addf %245, %246 : vector<2x32xf32>
    %248 = math.tanh %247 : vector<2x32xf32>
    %249 = arith.mulf %244, %248 : vector<2x32xf32>
    %250 = tpu.concatenate %53, %81, %109, %137, %165, %193, %221, %249 in 0 : vector<2x32xf32>, vector<2x32xf32>, vector<2x32xf32>, vector<2x32xf32>, vector<2x32xf32>, vector<2x32xf32>, vector<2x32xf32>, vector<2x32xf32> -> vector<16x32xf32>
    %c0_42 = arith.constant 0 : index
    %c0_43 = arith.constant 0 : index
    %251 = vector.load %arg4[%c0_42, %c0_43] : memref<32x128xf32, #tpu.memory_space<vmem>>, vector<32x128xf32>
    %c0_44 = arith.constant 0 : index
    %c0_45 = arith.constant 0 : index
    %252 = vector.load %arg5[%c0_44, %c0_45] : memref<32x128xf32, #tpu.memory_space<vmem>>, vector<32x128xf32>
    %c0_46 = arith.constant 0 : index
    %c0_47 = arith.constant 0 : index
    %253 = vector.load %arg6[%c0_46, %c0_47] : memref<1x128xf32, #tpu.memory_space<vmem>>, vector<1x128xf32>
    %cst_48 = arith.constant dense<0.000000e+00> : vector<16x128xf32>
    %254 = tpu.matmul %250, %251, %cst_48 {dimension_numbers = #tpu.dot_dimension_numbers<[1], [0], [0], [1], [0, 0, 1, 1], [], []>} : vector<16x32xf32>, vector<32x128xf32>, vector<16x128xf32> -> vector<16x128xf32>
    %255 = vector.broadcast %253 : vector<1x128xf32> to vector<16x128xf32>
    %256 = arith.addf %254, %255 : vector<16x128xf32>
    %cst_49 = arith.constant 0.000000e+00 : f32
    %257 = vector.broadcast %cst_49 : f32 to vector<2x32xf32>
    %cst_50 = arith.constant 0.000000e+00 : f32
    %258 = vector.broadcast %cst_50 : f32 to vector<2x32xf32>
    %259 = vector.extract_strided_slice %256 {offsets = [0, 0], sizes = [2, 128], strides = [1, 1]} : vector<16x128xf32> to vector<2x128xf32>
    %cst_51 = arith.constant dense<0.000000e+00> : vector<2x128xf32>
    %260 = tpu.matmul %257, %252, %cst_51 {dimension_numbers = #tpu.dot_dimension_numbers<[1], [0], [0], [1], [0, 0, 1, 1], [], []>} : vector<2x32xf32>, vector<32x128xf32>, vector<2x128xf32> -> vector<2x128xf32>
    %261 = arith.addf %259, %260 : vector<2x128xf32>
    %262 = vector.extract_strided_slice %261 {offsets = [0, 0], sizes = [2, 32], strides = [1, 1]} : vector<2x128xf32> to vector<2x32xf32>
    %263 = arith.negf %262 : vector<2x32xf32>
    %264 = math.exp %263 : vector<2x32xf32>
    %cst_52 = arith.constant 1.000000e+00 : f32
    %265 = vector.broadcast %cst_52 : f32 to vector<2x32xf32>
    %266 = arith.addf %265, %264 : vector<2x32xf32>
    %267 = arith.divf %265, %266 : vector<2x32xf32>
    %268 = vector.extract_strided_slice %261 {offsets = [0, 32], sizes = [2, 32], strides = [1, 1]} : vector<2x128xf32> to vector<2x32xf32>
    %269 = arith.negf %268 : vector<2x32xf32>
    %270 = math.exp %269 : vector<2x32xf32>
    %cst_53 = arith.constant 1.000000e+00 : f32
    %271 = vector.broadcast %cst_53 : f32 to vector<2x32xf32>
    %272 = arith.addf %271, %270 : vector<2x32xf32>
    %273 = arith.divf %271, %272 : vector<2x32xf32>
    %274 = vector.extract_strided_slice %261 {offsets = [0, 64], sizes = [2, 32], strides = [1, 1]} : vector<2x128xf32> to vector<2x32xf32>
    %275 = math.tanh %274 : vector<2x32xf32>
    %276 = vector.extract_strided_slice %261 {offsets = [0, 96], sizes = [2, 32], strides = [1, 1]} : vector<2x128xf32> to vector<2x32xf32>
    %277 = arith.negf %276 : vector<2x32xf32>
    %278 = math.exp %277 : vector<2x32xf32>
    %cst_54 = arith.constant 1.000000e+00 : f32
    %279 = vector.broadcast %cst_54 : f32 to vector<2x32xf32>
    %280 = arith.addf %279, %278 : vector<2x32xf32>
    %281 = arith.divf %279, %280 : vector<2x32xf32>
    %282 = arith.mulf %273, %258 : vector<2x32xf32>
    %283 = arith.mulf %267, %275 : vector<2x32xf32>
    %284 = arith.addf %282, %283 : vector<2x32xf32>
    %285 = math.tanh %284 : vector<2x32xf32>
    %286 = arith.mulf %281, %285 : vector<2x32xf32>
    %287 = vector.extract_strided_slice %256 {offsets = [2, 0], sizes = [2, 128], strides = [1, 1]} : vector<16x128xf32> to vector<2x128xf32>
    %cst_55 = arith.constant dense<0.000000e+00> : vector<2x128xf32>
    %288 = tpu.matmul %286, %252, %cst_55 {dimension_numbers = #tpu.dot_dimension_numbers<[1], [0], [0], [1], [0, 0, 1, 1], [], []>} : vector<2x32xf32>, vector<32x128xf32>, vector<2x128xf32> -> vector<2x128xf32>
    %289 = arith.addf %287, %288 : vector<2x128xf32>
    %290 = vector.extract_strided_slice %289 {offsets = [0, 0], sizes = [2, 32], strides = [1, 1]} : vector<2x128xf32> to vector<2x32xf32>
    %291 = arith.negf %290 : vector<2x32xf32>
    %292 = math.exp %291 : vector<2x32xf32>
    %cst_56 = arith.constant 1.000000e+00 : f32
    %293 = vector.broadcast %cst_56 : f32 to vector<2x32xf32>
    %294 = arith.addf %293, %292 : vector<2x32xf32>
    %295 = arith.divf %293, %294 : vector<2x32xf32>
    %296 = vector.extract_strided_slice %289 {offsets = [0, 32], sizes = [2, 32], strides = [1, 1]} : vector<2x128xf32> to vector<2x32xf32>
    %297 = arith.negf %296 : vector<2x32xf32>
    %298 = math.exp %297 : vector<2x32xf32>
    %cst_57 = arith.constant 1.000000e+00 : f32
    %299 = vector.broadcast %cst_57 : f32 to vector<2x32xf32>
    %300 = arith.addf %299, %298 : vector<2x32xf32>
    %301 = arith.divf %299, %300 : vector<2x32xf32>
    %302 = vector.extract_strided_slice %289 {offsets = [0, 64], sizes = [2, 32], strides = [1, 1]} : vector<2x128xf32> to vector<2x32xf32>
    %303 = math.tanh %302 : vector<2x32xf32>
    %304 = vector.extract_strided_slice %289 {offsets = [0, 96], sizes = [2, 32], strides = [1, 1]} : vector<2x128xf32> to vector<2x32xf32>
    %305 = arith.negf %304 : vector<2x32xf32>
    %306 = math.exp %305 : vector<2x32xf32>
    %cst_58 = arith.constant 1.000000e+00 : f32
    %307 = vector.broadcast %cst_58 : f32 to vector<2x32xf32>
    %308 = arith.addf %307, %306 : vector<2x32xf32>
    %309 = arith.divf %307, %308 : vector<2x32xf32>
    %310 = arith.mulf %301, %284 : vector<2x32xf32>
    %311 = arith.mulf %295, %303 : vector<2x32xf32>
    %312 = arith.addf %310, %311 : vector<2x32xf32>
    %313 = math.tanh %312 : vector<2x32xf32>
    %314 = arith.mulf %309, %313 : vector<2x32xf32>
    %315 = vector.extract_strided_slice %256 {offsets = [4, 0], sizes = [2, 128], strides = [1, 1]} : vector<16x128xf32> to vector<2x128xf32>
    %cst_59 = arith.constant dense<0.000000e+00> : vector<2x128xf32>
    %316 = tpu.matmul %314, %252, %cst_59 {dimension_numbers = #tpu.dot_dimension_numbers<[1], [0], [0], [1], [0, 0, 1, 1], [], []>} : vector<2x32xf32>, vector<32x128xf32>, vector<2x128xf32> -> vector<2x128xf32>
    %317 = arith.addf %315, %316 : vector<2x128xf32>
    %318 = vector.extract_strided_slice %317 {offsets = [0, 0], sizes = [2, 32], strides = [1, 1]} : vector<2x128xf32> to vector<2x32xf32>
    %319 = arith.negf %318 : vector<2x32xf32>
    %320 = math.exp %319 : vector<2x32xf32>
    %cst_60 = arith.constant 1.000000e+00 : f32
    %321 = vector.broadcast %cst_60 : f32 to vector<2x32xf32>
    %322 = arith.addf %321, %320 : vector<2x32xf32>
    %323 = arith.divf %321, %322 : vector<2x32xf32>
    %324 = vector.extract_strided_slice %317 {offsets = [0, 32], sizes = [2, 32], strides = [1, 1]} : vector<2x128xf32> to vector<2x32xf32>
    %325 = arith.negf %324 : vector<2x32xf32>
    %326 = math.exp %325 : vector<2x32xf32>
    %cst_61 = arith.constant 1.000000e+00 : f32
    %327 = vector.broadcast %cst_61 : f32 to vector<2x32xf32>
    %328 = arith.addf %327, %326 : vector<2x32xf32>
    %329 = arith.divf %327, %328 : vector<2x32xf32>
    %330 = vector.extract_strided_slice %317 {offsets = [0, 64], sizes = [2, 32], strides = [1, 1]} : vector<2x128xf32> to vector<2x32xf32>
    %331 = math.tanh %330 : vector<2x32xf32>
    %332 = vector.extract_strided_slice %317 {offsets = [0, 96], sizes = [2, 32], strides = [1, 1]} : vector<2x128xf32> to vector<2x32xf32>
    %333 = arith.negf %332 : vector<2x32xf32>
    %334 = math.exp %333 : vector<2x32xf32>
    %cst_62 = arith.constant 1.000000e+00 : f32
    %335 = vector.broadcast %cst_62 : f32 to vector<2x32xf32>
    %336 = arith.addf %335, %334 : vector<2x32xf32>
    %337 = arith.divf %335, %336 : vector<2x32xf32>
    %338 = arith.mulf %329, %312 : vector<2x32xf32>
    %339 = arith.mulf %323, %331 : vector<2x32xf32>
    %340 = arith.addf %338, %339 : vector<2x32xf32>
    %341 = math.tanh %340 : vector<2x32xf32>
    %342 = arith.mulf %337, %341 : vector<2x32xf32>
    %343 = vector.extract_strided_slice %256 {offsets = [6, 0], sizes = [2, 128], strides = [1, 1]} : vector<16x128xf32> to vector<2x128xf32>
    %cst_63 = arith.constant dense<0.000000e+00> : vector<2x128xf32>
    %344 = tpu.matmul %342, %252, %cst_63 {dimension_numbers = #tpu.dot_dimension_numbers<[1], [0], [0], [1], [0, 0, 1, 1], [], []>} : vector<2x32xf32>, vector<32x128xf32>, vector<2x128xf32> -> vector<2x128xf32>
    %345 = arith.addf %343, %344 : vector<2x128xf32>
    %346 = vector.extract_strided_slice %345 {offsets = [0, 0], sizes = [2, 32], strides = [1, 1]} : vector<2x128xf32> to vector<2x32xf32>
    %347 = arith.negf %346 : vector<2x32xf32>
    %348 = math.exp %347 : vector<2x32xf32>
    %cst_64 = arith.constant 1.000000e+00 : f32
    %349 = vector.broadcast %cst_64 : f32 to vector<2x32xf32>
    %350 = arith.addf %349, %348 : vector<2x32xf32>
    %351 = arith.divf %349, %350 : vector<2x32xf32>
    %352 = vector.extract_strided_slice %345 {offsets = [0, 32], sizes = [2, 32], strides = [1, 1]} : vector<2x128xf32> to vector<2x32xf32>
    %353 = arith.negf %352 : vector<2x32xf32>
    %354 = math.exp %353 : vector<2x32xf32>
    %cst_65 = arith.constant 1.000000e+00 : f32
    %355 = vector.broadcast %cst_65 : f32 to vector<2x32xf32>
    %356 = arith.addf %355, %354 : vector<2x32xf32>
    %357 = arith.divf %355, %356 : vector<2x32xf32>
    %358 = vector.extract_strided_slice %345 {offsets = [0, 64], sizes = [2, 32], strides = [1, 1]} : vector<2x128xf32> to vector<2x32xf32>
    %359 = math.tanh %358 : vector<2x32xf32>
    %360 = vector.extract_strided_slice %345 {offsets = [0, 96], sizes = [2, 32], strides = [1, 1]} : vector<2x128xf32> to vector<2x32xf32>
    %361 = arith.negf %360 : vector<2x32xf32>
    %362 = math.exp %361 : vector<2x32xf32>
    %cst_66 = arith.constant 1.000000e+00 : f32
    %363 = vector.broadcast %cst_66 : f32 to vector<2x32xf32>
    %364 = arith.addf %363, %362 : vector<2x32xf32>
    %365 = arith.divf %363, %364 : vector<2x32xf32>
    %366 = arith.mulf %357, %340 : vector<2x32xf32>
    %367 = arith.mulf %351, %359 : vector<2x32xf32>
    %368 = arith.addf %366, %367 : vector<2x32xf32>
    %369 = math.tanh %368 : vector<2x32xf32>
    %370 = arith.mulf %365, %369 : vector<2x32xf32>
    %371 = vector.extract_strided_slice %256 {offsets = [8, 0], sizes = [2, 128], strides = [1, 1]} : vector<16x128xf32> to vector<2x128xf32>
    %cst_67 = arith.constant dense<0.000000e+00> : vector<2x128xf32>
    %372 = tpu.matmul %370, %252, %cst_67 {dimension_numbers = #tpu.dot_dimension_numbers<[1], [0], [0], [1], [0, 0, 1, 1], [], []>} : vector<2x32xf32>, vector<32x128xf32>, vector<2x128xf32> -> vector<2x128xf32>
    %373 = arith.addf %371, %372 : vector<2x128xf32>
    %374 = vector.extract_strided_slice %373 {offsets = [0, 0], sizes = [2, 32], strides = [1, 1]} : vector<2x128xf32> to vector<2x32xf32>
    %375 = arith.negf %374 : vector<2x32xf32>
    %376 = math.exp %375 : vector<2x32xf32>
    %cst_68 = arith.constant 1.000000e+00 : f32
    %377 = vector.broadcast %cst_68 : f32 to vector<2x32xf32>
    %378 = arith.addf %377, %376 : vector<2x32xf32>
    %379 = arith.divf %377, %378 : vector<2x32xf32>
    %380 = vector.extract_strided_slice %373 {offsets = [0, 32], sizes = [2, 32], strides = [1, 1]} : vector<2x128xf32> to vector<2x32xf32>
    %381 = arith.negf %380 : vector<2x32xf32>
    %382 = math.exp %381 : vector<2x32xf32>
    %cst_69 = arith.constant 1.000000e+00 : f32
    %383 = vector.broadcast %cst_69 : f32 to vector<2x32xf32>
    %384 = arith.addf %383, %382 : vector<2x32xf32>
    %385 = arith.divf %383, %384 : vector<2x32xf32>
    %386 = vector.extract_strided_slice %373 {offsets = [0, 64], sizes = [2, 32], strides = [1, 1]} : vector<2x128xf32> to vector<2x32xf32>
    %387 = math.tanh %386 : vector<2x32xf32>
    %388 = vector.extract_strided_slice %373 {offsets = [0, 96], sizes = [2, 32], strides = [1, 1]} : vector<2x128xf32> to vector<2x32xf32>
    %389 = arith.negf %388 : vector<2x32xf32>
    %390 = math.exp %389 : vector<2x32xf32>
    %cst_70 = arith.constant 1.000000e+00 : f32
    %391 = vector.broadcast %cst_70 : f32 to vector<2x32xf32>
    %392 = arith.addf %391, %390 : vector<2x32xf32>
    %393 = arith.divf %391, %392 : vector<2x32xf32>
    %394 = arith.mulf %385, %368 : vector<2x32xf32>
    %395 = arith.mulf %379, %387 : vector<2x32xf32>
    %396 = arith.addf %394, %395 : vector<2x32xf32>
    %397 = math.tanh %396 : vector<2x32xf32>
    %398 = arith.mulf %393, %397 : vector<2x32xf32>
    %399 = vector.extract_strided_slice %256 {offsets = [10, 0], sizes = [2, 128], strides = [1, 1]} : vector<16x128xf32> to vector<2x128xf32>
    %cst_71 = arith.constant dense<0.000000e+00> : vector<2x128xf32>
    %400 = tpu.matmul %398, %252, %cst_71 {dimension_numbers = #tpu.dot_dimension_numbers<[1], [0], [0], [1], [0, 0, 1, 1], [], []>} : vector<2x32xf32>, vector<32x128xf32>, vector<2x128xf32> -> vector<2x128xf32>
    %401 = arith.addf %399, %400 : vector<2x128xf32>
    %402 = vector.extract_strided_slice %401 {offsets = [0, 0], sizes = [2, 32], strides = [1, 1]} : vector<2x128xf32> to vector<2x32xf32>
    %403 = arith.negf %402 : vector<2x32xf32>
    %404 = math.exp %403 : vector<2x32xf32>
    %cst_72 = arith.constant 1.000000e+00 : f32
    %405 = vector.broadcast %cst_72 : f32 to vector<2x32xf32>
    %406 = arith.addf %405, %404 : vector<2x32xf32>
    %407 = arith.divf %405, %406 : vector<2x32xf32>
    %408 = vector.extract_strided_slice %401 {offsets = [0, 32], sizes = [2, 32], strides = [1, 1]} : vector<2x128xf32> to vector<2x32xf32>
    %409 = arith.negf %408 : vector<2x32xf32>
    %410 = math.exp %409 : vector<2x32xf32>
    %cst_73 = arith.constant 1.000000e+00 : f32
    %411 = vector.broadcast %cst_73 : f32 to vector<2x32xf32>
    %412 = arith.addf %411, %410 : vector<2x32xf32>
    %413 = arith.divf %411, %412 : vector<2x32xf32>
    %414 = vector.extract_strided_slice %401 {offsets = [0, 64], sizes = [2, 32], strides = [1, 1]} : vector<2x128xf32> to vector<2x32xf32>
    %415 = math.tanh %414 : vector<2x32xf32>
    %416 = vector.extract_strided_slice %401 {offsets = [0, 96], sizes = [2, 32], strides = [1, 1]} : vector<2x128xf32> to vector<2x32xf32>
    %417 = arith.negf %416 : vector<2x32xf32>
    %418 = math.exp %417 : vector<2x32xf32>
    %cst_74 = arith.constant 1.000000e+00 : f32
    %419 = vector.broadcast %cst_74 : f32 to vector<2x32xf32>
    %420 = arith.addf %419, %418 : vector<2x32xf32>
    %421 = arith.divf %419, %420 : vector<2x32xf32>
    %422 = arith.mulf %413, %396 : vector<2x32xf32>
    %423 = arith.mulf %407, %415 : vector<2x32xf32>
    %424 = arith.addf %422, %423 : vector<2x32xf32>
    %425 = math.tanh %424 : vector<2x32xf32>
    %426 = arith.mulf %421, %425 : vector<2x32xf32>
    %427 = vector.extract_strided_slice %256 {offsets = [12, 0], sizes = [2, 128], strides = [1, 1]} : vector<16x128xf32> to vector<2x128xf32>
    %cst_75 = arith.constant dense<0.000000e+00> : vector<2x128xf32>
    %428 = tpu.matmul %426, %252, %cst_75 {dimension_numbers = #tpu.dot_dimension_numbers<[1], [0], [0], [1], [0, 0, 1, 1], [], []>} : vector<2x32xf32>, vector<32x128xf32>, vector<2x128xf32> -> vector<2x128xf32>
    %429 = arith.addf %427, %428 : vector<2x128xf32>
    %430 = vector.extract_strided_slice %429 {offsets = [0, 0], sizes = [2, 32], strides = [1, 1]} : vector<2x128xf32> to vector<2x32xf32>
    %431 = arith.negf %430 : vector<2x32xf32>
    %432 = math.exp %431 : vector<2x32xf32>
    %cst_76 = arith.constant 1.000000e+00 : f32
    %433 = vector.broadcast %cst_76 : f32 to vector<2x32xf32>
    %434 = arith.addf %433, %432 : vector<2x32xf32>
    %435 = arith.divf %433, %434 : vector<2x32xf32>
    %436 = vector.extract_strided_slice %429 {offsets = [0, 32], sizes = [2, 32], strides = [1, 1]} : vector<2x128xf32> to vector<2x32xf32>
    %437 = arith.negf %436 : vector<2x32xf32>
    %438 = math.exp %437 : vector<2x32xf32>
    %cst_77 = arith.constant 1.000000e+00 : f32
    %439 = vector.broadcast %cst_77 : f32 to vector<2x32xf32>
    %440 = arith.addf %439, %438 : vector<2x32xf32>
    %441 = arith.divf %439, %440 : vector<2x32xf32>
    %442 = vector.extract_strided_slice %429 {offsets = [0, 64], sizes = [2, 32], strides = [1, 1]} : vector<2x128xf32> to vector<2x32xf32>
    %443 = math.tanh %442 : vector<2x32xf32>
    %444 = vector.extract_strided_slice %429 {offsets = [0, 96], sizes = [2, 32], strides = [1, 1]} : vector<2x128xf32> to vector<2x32xf32>
    %445 = arith.negf %444 : vector<2x32xf32>
    %446 = math.exp %445 : vector<2x32xf32>
    %cst_78 = arith.constant 1.000000e+00 : f32
    %447 = vector.broadcast %cst_78 : f32 to vector<2x32xf32>
    %448 = arith.addf %447, %446 : vector<2x32xf32>
    %449 = arith.divf %447, %448 : vector<2x32xf32>
    %450 = arith.mulf %441, %424 : vector<2x32xf32>
    %451 = arith.mulf %435, %443 : vector<2x32xf32>
    %452 = arith.addf %450, %451 : vector<2x32xf32>
    %453 = math.tanh %452 : vector<2x32xf32>
    %454 = arith.mulf %449, %453 : vector<2x32xf32>
    %455 = vector.extract_strided_slice %256 {offsets = [14, 0], sizes = [2, 128], strides = [1, 1]} : vector<16x128xf32> to vector<2x128xf32>
    %cst_79 = arith.constant dense<0.000000e+00> : vector<2x128xf32>
    %456 = tpu.matmul %454, %252, %cst_79 {dimension_numbers = #tpu.dot_dimension_numbers<[1], [0], [0], [1], [0, 0, 1, 1], [], []>} : vector<2x32xf32>, vector<32x128xf32>, vector<2x128xf32> -> vector<2x128xf32>
    %457 = arith.addf %455, %456 : vector<2x128xf32>
    %458 = vector.extract_strided_slice %457 {offsets = [0, 0], sizes = [2, 32], strides = [1, 1]} : vector<2x128xf32> to vector<2x32xf32>
    %459 = arith.negf %458 : vector<2x32xf32>
    %460 = math.exp %459 : vector<2x32xf32>
    %cst_80 = arith.constant 1.000000e+00 : f32
    %461 = vector.broadcast %cst_80 : f32 to vector<2x32xf32>
    %462 = arith.addf %461, %460 : vector<2x32xf32>
    %463 = arith.divf %461, %462 : vector<2x32xf32>
    %464 = vector.extract_strided_slice %457 {offsets = [0, 32], sizes = [2, 32], strides = [1, 1]} : vector<2x128xf32> to vector<2x32xf32>
    %465 = arith.negf %464 : vector<2x32xf32>
    %466 = math.exp %465 : vector<2x32xf32>
    %cst_81 = arith.constant 1.000000e+00 : f32
    %467 = vector.broadcast %cst_81 : f32 to vector<2x32xf32>
    %468 = arith.addf %467, %466 : vector<2x32xf32>
    %469 = arith.divf %467, %468 : vector<2x32xf32>
    %470 = vector.extract_strided_slice %457 {offsets = [0, 64], sizes = [2, 32], strides = [1, 1]} : vector<2x128xf32> to vector<2x32xf32>
    %471 = math.tanh %470 : vector<2x32xf32>
    %472 = vector.extract_strided_slice %457 {offsets = [0, 96], sizes = [2, 32], strides = [1, 1]} : vector<2x128xf32> to vector<2x32xf32>
    %473 = arith.negf %472 : vector<2x32xf32>
    %474 = math.exp %473 : vector<2x32xf32>
    %cst_82 = arith.constant 1.000000e+00 : f32
    %475 = vector.broadcast %cst_82 : f32 to vector<2x32xf32>
    %476 = arith.addf %475, %474 : vector<2x32xf32>
    %477 = arith.divf %475, %476 : vector<2x32xf32>
    %478 = arith.mulf %469, %452 : vector<2x32xf32>
    %479 = arith.mulf %463, %471 : vector<2x32xf32>
    %480 = arith.addf %478, %479 : vector<2x32xf32>
    %481 = math.tanh %480 : vector<2x32xf32>
    %482 = arith.mulf %477, %481 : vector<2x32xf32>
    %483 = tpu.concatenate %249, %482 in 0 : vector<2x32xf32>, vector<2x32xf32> -> vector<4x32xf32>
    %cst_83 = arith.constant 0.000000e+00 : f32
    %484 = vector.broadcast %cst_83 : f32 to vector<4x32xf32>
    %485 = arith.maximumf %483, %484 : vector<4x32xf32>
    %c0_84 = arith.constant 0 : index
    %c0_85 = arith.constant 0 : index
    %486 = vector.load %arg7[%c0_84, %c0_85] : memref<32x128xf32, #tpu.memory_space<vmem>>, vector<32x128xf32>
    %cst_86 = arith.constant dense<0.000000e+00> : vector<4x128xf32>
    %487 = tpu.matmul %485, %486, %cst_86 {dimension_numbers = #tpu.dot_dimension_numbers<[1], [0], [0], [1], [0, 0, 1, 1], [], []>} : vector<4x32xf32>, vector<32x128xf32>, vector<4x128xf32> -> vector<4x128xf32>
    %c0_87 = arith.constant 0 : index
    %c0_88 = arith.constant 0 : index
    %488 = vector.load %arg8[%c0_87, %c0_88] : memref<1x128xf32, #tpu.memory_space<vmem>>, vector<1x128xf32>
    %489 = vector.broadcast %488 : vector<1x128xf32> to vector<4x128xf32>
    %490 = arith.addf %487, %489 : vector<4x128xf32>
    %cst_89 = arith.constant 0.000000e+00 : f32
    %491 = vector.broadcast %cst_89 : f32 to vector<4x128xf32>
    %492 = arith.maximumf %490, %491 : vector<4x128xf32>
    %c0_90 = arith.constant 0 : index
    %c0_91 = arith.constant 0 : index
    %493 = vector.load %arg9[%c0_90, %c0_91] : memref<128x5xf32, #tpu.memory_space<vmem>>, vector<128x5xf32>
    %cst_92 = arith.constant dense<0.000000e+00> : vector<4x5xf32>
    %494 = tpu.matmul %492, %493, %cst_92 {dimension_numbers = #tpu.dot_dimension_numbers<[1], [0], [0], [1], [0, 0, 1, 1], [], []>} : vector<4x128xf32>, vector<128x5xf32>, vector<4x5xf32> -> vector<4x5xf32>
    %c0_93 = arith.constant 0 : index
    %c0_94 = arith.constant 0 : index
    %495 = vector.load %arg10[%c0_93, %c0_94] : memref<1x5xf32, #tpu.memory_space<vmem>>, vector<1x5xf32>
    %496 = vector.broadcast %495 : vector<1x5xf32> to vector<4x5xf32>
    %497 = arith.addf %494, %496 : vector<4x5xf32>
    %c0_95 = arith.constant 0 : index
    %c0_96 = arith.constant 0 : index
    %498 = vector.load %arg11[%c0_95, %c0_96] : memref<4x5xf32, #tpu.memory_space<vmem>>, vector<4x5xf32>
    tpu.vector_store %arg11[%c0_95, %c0_96], %497 {strides = array<i32>} : memref<4x5xf32, #tpu.memory_space<vmem>>, vector<4x5xf32>,
    return
  }
}

</mosaic_0001>

<llo_original>
// kernel: lstm_forward.1
$region0: #{lstm_forward.1}
  #allocation0 [shape = 'u32[]', space=smem, size = 0x4, offset = 0x4, fixed_abs, tag = 'smem constant byte address 0x4 - core index']
  #allocation1 [shape = 'u32[72,128]{1,0:T(1,128)}', space=vmem, size = 0x9000, scoped, tag = 'internal scratch']
  %s0 = inlined_call_operand.hbm [shape: f32[2,8,8], index: 0, kind: input, shape index: {}]
  %s1 = inlined_call_operand.vmem [shape: f32[8,128], index: 1, kind: input, shape index: {}]
  %s2 = inlined_call_operand.vmem [shape: f32[32,128], index: 2, kind: input, shape index: {}]
  %s3 = inlined_call_operand.hbm [shape: f32[1,128], index: 3, kind: input, shape index: {}]
  %s4 = inlined_call_operand.vmem [shape: f32[32,128], index: 4, kind: input, shape index: {}]
  %s5 = inlined_call_operand.vmem [shape: f32[32,128], index: 5, kind: input, shape index: {}]
  %s6 = inlined_call_operand.hbm [shape: f32[1,128], index: 6, kind: input, shape index: {}]
  %s7 = inlined_call_operand.vmem [shape: f32[32,128], index: 7, kind: input, shape index: {}]
  %s8 = inlined_call_operand.hbm [shape: f32[1,128], index: 8, kind: input, shape index: {}]
  %s9 = inlined_call_operand.vmem [shape: f32[128,5], index: 9, kind: input, shape index: {}]
  %s10 = inlined_call_operand.hbm [shape: f32[1,5], index: 10, kind: input, shape index: {}]
  %s11 = inlined_call_operand.hbm [shape: f32[4,5], index: 11, kind: output, shape index: {}]
  %s12 = sld [smem:[#allocation0]]
  $region74: #{lstm_forward.1} parent=0
    _
  %s14 = ssub.s32 1, %s12
  %s15 = scalar_select 0, %s14, %s12
  $region1: #{lstm_forward.1} parent=0
    #allocation2 [shape = 'u8[8192]{0}', space=vmem, size = 0x2000, scoped, tag = 'input window, operand 0, single buffered']
    #allocation3 [shape = 's32[1]{0}', space=sflag, size = 0x4, scoped, tag = 'scoped memory for lstm_forward.1']
    #allocation4 [shape = 's32[1]{0}', space=sflag, size = 0x4, scoped, tag = 'scoped memory for lstm_forward.1']
    #allocation5 [shape = 'u8[512]{0}', space=vmem, size = 0x400, scoped, tag = 'input window, operand 3, single buffered']
    #allocation6 [shape = 's32[1]{0}', space=sflag, size = 0x4, scoped, tag = 'scoped memory for lstm_forward.1']
    #allocation7 [shape = 'u8[512]{0}', space=vmem, size = 0x400, scoped, tag = 'input window, operand 6, single buffered']
    #allocation8 [shape = 'u8[512]{0}', space=vmem, size = 0x400, scoped, tag = 'input window, operand 8, single buffered']
    #allocation9 [shape = 's32[1]{0}', space=sflag, size = 0x4, scoped, tag = 'scoped memory for lstm_forward.1']
    #allocation10 [shape = 'u8[512]{0}', space=vmem, size = 0x400, scoped, tag = 'input window, operand 10, single buffered']
    #allocation11 [shape = 'u8[2048]{0}', space=vmem, size = 0x800, scoped, tag = 'output window, operand 0, single buffered']
    %16 = vsyncpa [#allocation3], 0
    %17 = vsyncpa [#allocation6], 0
    %18 = vsyncpa [#allocation9], 0
    %19 = vsyncpa [#allocation4], 0
    // Predicated region
    $region2: #{lstm_forward.1} parent=1 // pred_check
      _
    $region3: #{lstm_forward.1} parent=1 // pred_check_branch
      %21 = sbr.rel (0) target = $region5
    $region4: #{lstm_forward.1} parent=1 // pred_region
      %23 = vsyncadd [#allocation3], 0
      %s24 = sshll.u32 %s0, 4
      %s25 = int_to_ptr.hbm [resolvable:$true] %s24
      %s26 = sshll.u32 [#allocation2], 4
      %s27 = int_to_ptr.vmem [resolvable:$true] %s26
      %32 = dma.hbm_to_vmem [thread:$0]  %s25, 256, %s27, [#allocation3], 128, 128, 8
    $region5: #{lstm_forward.1} parent=1 // pred_fallthru
      _
    // Predicated region
    $region6: #{lstm_forward.1} parent=1 // pred_check
      _
    $region7: #{lstm_forward.1} parent=1 // pred_check_branch
      %34 = sbr.rel (0) target = $region9
    $region8: #{lstm_forward.1} parent=1 // pred_region
      _
    $region9: #{lstm_forward.1} parent=1 // pred_fallthru
      _
    // Predicated region
    $region10: #{lstm_forward.1} parent=1 // pred_check
      _
    $region11: #{lstm_forward.1} parent=1 // pred_check_branch
      %36 = sbr.rel (0) target = $region13
    $region12: #{lstm_forward.1} parent=1 // pred_region
      _
    $region13: #{lstm_forward.1} parent=1 // pred_fallthru
      _
    // Predicated region
    $region14: #{lstm_forward.1} parent=1 // pred_check
      _
    $region15: #{lstm_forward.1} parent=1 // pred_check_branch
      %38 = sbr.rel (0) target = $region17
    $region16: #{lstm_forward.1} parent=1 // pred_region
      %40 = vsyncadd [#allocation6], 0
      %s42 = sshll.u32 %s3, 4
      %s43 = int_to_ptr.hbm [resolvable:$true] %s42
      %s44 = sshll.u32 [#allocation5], 4
      %s45 = int_to_ptr.vmem [resolvable:$true] %s44
      %47 = dma.hbm_to_vmem [thread:$0]  %s43, 16, %s45, [#allocation6]
    $region17: #{lstm_forward.1} parent=1 // pred_fallthru
      _
    // Predicated region
    $region18: #{lstm_forward.1} parent=1 // pred_check
      _
    $region19: #{lstm_forward.1} parent=1 // pred_check_branch
      %49 = sbr.rel (0) target = $region21
    $region20: #{lstm_forward.1} parent=1 // pred_region
      _
    $region21: #{lstm_forward.1} parent=1 // pred_fallthru
      _
    // Predicated region
    $region22: #{lstm_forward.1} parent=1 // pred_check
      _
    $region23: #{lstm_forward.1} parent=1 // pred_check_branch
      %51 = sbr.rel (0) target = $region25
    $region24: #{lstm_forward.1} parent=1 // pred_region
      _
    $region25: #{lstm_forward.1} parent=1 // pred_fallthru
      _
    // Predicated region
    $region26: #{lstm_forward.1} parent=1 // pred_check
      _
    $region27: #{lstm_forward.1} parent=1 // pred_check_branch
      %53 = sbr.rel (0) target = $region29
    $region28: #{lstm_forward.1} parent=1 // pred_region
      %55 = vsyncadd [#allocation6], 0
      %s57 = sshll.u32 %s6, 4
      %s58 = int_to_ptr.hbm [resolvable:$true] %s57
      %s59 = sshll.u32 [#allocation7], 4
      %s60 = int_to_ptr.vmem [resolvable:$true] %s59
      %62 = dma.hbm_to_vmem [thread:$0]  %s58, 16, %s60, [#allocation6]
    $region29: #{lstm_forward.1} parent=1 // pred_fallthru
      _
    // Predicated region
    $region30: #{lstm_forward.1} parent=1 // pred_check
      _
    $region31: #{lstm_forward.1} parent=1 // pred_check_branch
      %64 = sbr.rel (0) target = $region33
    $region32: #{lstm_forward.1} parent=1 // pred_region
      _
    $region33: #{lstm_forward.1} parent=1 // pred_fallthru
      _
    // Predicated region
    $region34: #{lstm_forward.1} parent=1 // pred_check
      _
    $region35: #{lstm_forward.1} parent=1 // pred_check_branch
      %66 = sbr.rel (0) target = $region37
    $region36: #{lstm_forward.1} parent=1 // pred_region
      %68 = vsyncadd [#allocation9], 0
      %s70 = sshll.u32 %s8, 4
      %s71 = int_to_ptr.hbm [resolvable:$true] %s70
      %s72 = sshll.u32 [#allocation8], 4
      %s73 = int_to_ptr.vmem [resolvable:$true] %s72
      %75 = dma.hbm_to_vmem [thread:$0]  %s71, 16, %s73, [#allocation9]
    $region37: #{lstm_forward.1} parent=1 // pred_fallthru
      _
    // Predicated region
    $region38: #{lstm_forward.1} parent=1 // pred_check
      _
    $region39: #{lstm_forward.1} parent=1 // pred_check_branch
      %77 = sbr.rel (0) target = $region41
    $region40: #{lstm_forward.1} parent=1 // pred_region
      _
    $region41: #{lstm_forward.1} parent=1 // pred_fallthru
      _
    // Predicated region
    $region42: #{lstm_forward.1} parent=1 // pred_check
      _
    $region43: #{lstm_forward.1} parent=1 // pred_check_branch
      %79 = sbr.rel (0) target = $region45
    $region44: #{lstm_forward.1} parent=1 // pred_region
      %81 = vsyncadd [#allocation9], 0
      %s83 = sshll.u32 %s10, 4
      %s84 = int_to_ptr.hbm [resolvable:$true] %s83
      %s85 = sshll.u32 [#allocation10], 4
      %s86 = int_to_ptr.vmem [resolvable:$true] %s85
      %88 = dma.hbm_to_vmem [thread:$0]  %s84, 16, %s86, [#allocation9]
    $region45: #{lstm_forward.1} parent=1 // pred_fallthru
      _
    // Predicated region
    $region46: #{lstm_forward.1} parent=1 // pred_check
      _
    $region47: #{lstm_forward.1} parent=1 // pred_check_branch
      %90 = sbr.rel (0) target = $region49
    $region48: #{lstm_forward.1} parent=1 // pred_region
      %92 = dma.done [#allocation3], 256
    $region49: #{lstm_forward.1} parent=1 // pred_fallthru
      _
    // Predicated region
    $region50: #{lstm_forward.1} parent=1 // pred_check
      _
    $region51: #{lstm_forward.1} parent=1 // pred_check_branch
      %94 = sbr.rel (0) target = $region53
    $region52: #{lstm_forward.1} parent=1 // pred_region
      %96 = dma.done [#allocation6], 16
    $region53: #{lstm_forward.1} parent=1 // pred_fallthru
      _
    // Predicated region
    $region54: #{lstm_forward.1} parent=1 // pred_check
      _
    $region55: #{lstm_forward.1} parent=1 // pred_check_branch
      %98 = sbr.rel (0) target = $region57
    $region56: #{lstm_forward.1} parent=1 // pred_region
      %100 = dma.done [#allocation6], 16
    $region57: #{lstm_forward.1} parent=1 // pred_fallthru
      _
    // Predicated region
    $region58: #{lstm_forward.1} parent=1 // pred_check
      _
    $region59: #{lstm_forward.1} parent=1 // pred_check_branch
      %102 = sbr.rel (0) target = $region61
    $region60: #{lstm_forward.1} parent=1 // pred_region
      %104 = dma.done [#allocation9], 16
    $region61: #{lstm_forward.1} parent=1 // pred_fallthru
      _
    // Predicated region
    $region62: #{lstm_forward.1} parent=1 // pred_check
      _
    $region63: #{lstm_forward.1} parent=1 // pred_check_branch
      %106 = sbr.rel (0) target = $region65
    $region64: #{lstm_forward.1} parent=1 // pred_region
      %108 = dma.done [#allocation9], 16
    $region65: #{lstm_forward.1} parent=1 // pred_fallthru
      _
    %v109 = vld [vmem:[#allocation2] sm:$0xff]
    %v110 = vld [vmem:[#allocation2 + $0x8] sm:$0xff]
    %v113 = vrot.slane %v110, 7
    %vm114 = vcmask 1041409
    %v115 = vsel %vm114, %v113, %v109
    %v117 = vrot.slane %v109, 7
    %v118 = vrot.slane %v110, 6
    %vm119 = vcmask 1043459
    %v120 = vsel %vm119, %v118, %v117
    %v122 = vrot.slane %v109, 6
    %v123 = vrot.slane %v110, 5
    %vm124 = vcmask 1045509
    %v125 = vsel %vm124, %v123, %v122
    %v127 = vrot.slane %v109, 5
    %v128 = vrot.slane %v110, 4
    %vm129 = vcmask 1047559
    %v130 = vsel %vm129, %v128, %v127
    %v132 = vrot.slane %v109, 4
    %v133 = vrot.slane %v110, 3
    %v134 = vsel %vm114, %v133, %v132
    %v136 = vrot.slane %v109, 3
    %v137 = vrot.slane %v110, 2
    %v138 = vsel %vm119, %v137, %v136
    %v140 = vrot.slane %v109, 2
    %v141 = vrot.slane %v110, 1
    %v142 = vsel %vm124, %v141, %v140
    %v144 = vrot.slane %v109, 1
    %v145 = vsel %vm129, %v110, %v144
    %vm147 = vcmask 1041408
    %v148 = vsel %vm147, %v115, %v120
    %vm149 = vcmask 1043456
    %v150 = vsel %vm149, %v148, %v125
    %vm151 = vcmask 1045504
    %v152 = vsel %vm151, %v150, %v130
    %v153 = vsel %vm147, %v134, %v138
    %v154 = vsel %vm149, %v153, %v142
    %v155 = vsel %vm151, %v154, %v145
    %v156 = vld [vmem:[%s1] sm:$0xff]
    %v157 = vld [vmem:[%s2] sm:$0xff]
    %v158 = vld [vmem:[%s2 + $0x8] sm:$0xff]
    %v159 = vld [vmem:[%s2 + $0x10] sm:$0xff]
    %v160 = vld [vmem:[%s2 + $0x18] sm:$0xff]
    %v161 = vld [vmem:[#allocation5] sm:$0x1]
    %v163 = vperm.slane %v161, 0
    %vm165 = vcmask 64512
    %v167 = vsel %vm165, %v152, 0
    %v170 = vsel %vm165, %v155, 0
    %172 = vmatpush.msra.mxu0 0.0
    %173 = vmatpush.msra.mxu0 0.0
    %174 = vmatpush.msra.mxu0 0.0
    %175 = vmatpush.msra.mxu0 0.0
    %176 = vmatpush.msra.mxu0 0.0
    %177 = vmatpush.msra.mxu0 0.0
    %178 = vmatpush.msra.mxu0 0.0
    %179 = vmatpush.msra.mxu0 0.0
    %180 = vmatpush.msra.mxu0 0.0
    %181 = vmatpush.msra.mxu0 0.0
    %182 = vmatpush.msra.mxu0 0.0
    %183 = vmatpush.msra.mxu0 0.0
    %184 = vmatpush.msra.mxu0 0.0
    %185 = vmatpush.msra.mxu0 0.0
    %186 = vmatpush.msra.mxu0 0.0
    %187 = vmatpush.msra.mxu0 %v156
    %188 = vmatmul.f32.gmra.mxu0 %v167
    %v189 = vpop.f32.mrf.mxu0
    %v190 = vadd.f32 %v163, %v189
    %191 = vmatmul.f32.gmra.mxu0 %v170
    %v192 = vpop.f32.mrf.mxu0
    %v193 = vadd.f32 %v163, %v192
    %194 = vdwg.mxu0
    %vm195 = vcmask 261120
    %v197 = vsel %vm195, 0.0, 0
    %199 = vmatpush.msra.mxu0 0.0
    %200 = vmatpush.msra.mxu0 0.0
    %201 = vmatpush.msra.mxu0 0.0
    %202 = vmatpush.msra.mxu0 0.0
    %203 = vmatpush.msra.mxu0 0.0
    %204 = vmatpush.msra.mxu0 0.0
    %205 = vmatpush.msra.mxu0 0.0
    %206 = vmatpush.msra.mxu0 0.0
    %207 = vmatpush.msra.mxu0 0.0
    %208 = vmatpush.msra.mxu0 0.0
    %209 = vmatpush.msra.mxu0 0.0
    %210 = vmatpush.msra.mxu0 0.0
    %211 = vmatpush.msra.mxu0 %v160
    %212 = vmatpush.msra.mxu0 %v159
    %213 = vmatpush.msra.mxu0 %v158
    %214 = vmatpush.msra.mxu0 %v157
    %215 = vmatmul.f32.gmra.mxu0 %v197
    %v216 = vpop.f32.mrf.mxu0
    %v217 = vadd.f32 0.0, %v216
    %218 = vdwg.mxu0
    %v219 = vadd.f32 %v190, %v217
    %v220 = vxor.u32 %v219, 2147483648
    %v221 = vmul.f32 %v220, 1.442695
    %v222 = vpow.pop %v221
    %v223 = vadd.f32 %v222, 1.0
    %v224 = vrcp.pop %v223
    %v225 = vmul.f32 %v223, %v224
    %v226 = vsub.f32 1.0, %v225
    %v227 = vmul.f32 %v224, %v226
    %v228 = vadd.f32 %v224, %v227
    %vm229 = vweird.f32 %v223
    %vm230 = vweird.f32 %v224
    %vm231 = vmor %vm229, %vm230
    %v232 = vsel %vm231, %v224, %v228
    %v233 = vand.u32 2147483647, %v223
    %vm234 = vcmp.eq.f32.partialorder %v233, 8.507059e+37
    %v235 = vand.u32 %v223, 2147483648
    %v236 = vor.u32 1.1754944e-38, %v235
    %v237 = vsel %vm234, %v236, %v232
    %v238 = vmul.f32 1.0, %v237
    %v239 = vtanh.pop %v219
    %v240 = vmul.f32 %v238, 0.0
    %242 = vrot.lane.b32.xlu0 %v239, 64
    %v243 = vpop.permute.xlu0 %242
    %v245 = vmul.f32 %v238, %v243
    %247 = vrot.lane.b32.xlu0 %v245, 32
    %v248 = vpop.permute.xlu0 %247
    %v250 = vadd.f32 %v240, %v248
    %v251 = vtanh.pop %v250
    %253 = vrot.lane.b32.xlu0 %v251, 64
    %v254 = vpop.permute.xlu0 %253
    %v256 = vmul.f32 %v238, %v254
    %258 = vrot.lane.b32.xlu0 %v256, 32
    %v259 = vpop.permute.xlu0 %258
    %v260 = vsel %vm195, %v259, 0
    %262 = vmatpush.msra.mxu0 0.0
    %263 = vmatpush.msra.mxu0 0.0
    %264 = vmatpush.msra.mxu0 0.0
    %265 = vmatpush.msra.mxu0 0.0
    %266 = vmatpush.msra.mxu0 0.0
    %267 = vmatpush.msra.mxu0 0.0
    %268 = vmatpush.msra.mxu0 0.0
    %269 = vmatpush.msra.mxu0 0.0
    %270 = vmatpush.msra.mxu0 0.0
    %271 = vmatpush.msra.mxu0 0.0
    %272 = vmatpush.msra.mxu0 0.0
    %273 = vmatpush.msra.mxu0 0.0
    %274 = vmatpush.msra.mxu0 %v160
    %275 = vmatpush.msra.mxu0 %v159
    %276 = vmatpush.msra.mxu0 %v158
    %277 = vmatpush.msra.mxu0 %v157
    %278 = vmatmul.f32.gmra.mxu0 %v260
    %v279 = vpop.f32.mrf.mxu0
    %v280 = vadd.f32 0.0, %v279
    %281 = vdwg.mxu0
    %v283 = vrot.slane %v280, 6
    %v285 = vadd.f32 %v190, %v283
    %v286 = vxor.u32 %v285, 2147483648
    %v287 = vmul.f32 %v286, 1.442695
    %v288 = vpow.pop %v287
    %v289 = vadd.f32 %v288, 1.0
    %v290 = vrcp.pop %v289
    %v291 = vmul.f32 %v289, %v290
    %v292 = vsub.f32 1.0, %v291
    %v293 = vmul.f32 %v290, %v292
    %v294 = vadd.f32 %v290, %v293
    %vm295 = vweird.f32 %v289
    %vm296 = vweird.f32 %v290
    %vm297 = vmor %vm295, %vm296
    %v298 = vsel %vm297, %v290, %v294
    %v299 = vand.u32 2147483647, %v289
    %vm300 = vcmp.eq.f32.partialorder %v299, 8.507059e+37
    %v301 = vand.u32 %v289, 2147483648
    %v302 = vor.u32 1.1754944e-38, %v301
    %v303 = vsel %vm300, %v302, %v298
    %v304 = vmul.f32 1.0, %v303
    %v305 = vtanh.pop %v285
    %v307 = vrot.slane %v250, 6
    %v309 = vmul.f32 %v304, %v307
    %311 = vrot.lane.b32.xlu0 %v305, 64
    %v312 = vpop.permute.xlu0 %311
    %v314 = vmul.f32 %v304, %v312
    %316 = vrot.lane.b32.xlu0 %v314, 32
    %v317 = vpop.permute.xlu0 %316
    %v319 = vadd.f32 %v309, %v317
    %v320 = vtanh.pop %v319
    %322 = vrot.lane.b32.xlu0 %v320, 64
    %v323 = vpop.permute.xlu0 %322
    %v325 = vmul.f32 %v304, %v323
    %v327 = vrot.slane %v325, 2
    %328 = vrot.lane.b32.xlu0 %v327, 32
    %v329 = vpop.permute.xlu0 %328
    %v330 = vsel %vm195, %v329, 0
    %332 = vmatpush.msra.mxu0 0.0
    %333 = vmatpush.msra.mxu0 0.0
    %334 = vmatpush.msra.mxu0 0.0
    %335 = vmatpush.msra.mxu0 0.0
    %336 = vmatpush.msra.mxu0 0.0
    %337 = vmatpush.msra.mxu0 0.0
    %338 = vmatpush.msra.mxu0 0.0
    %339 = vmatpush.msra.mxu0 0.0
    %340 = vmatpush.msra.mxu0 0.0
    %341 = vmatpush.msra.mxu0 0.0
    %342 = vmatpush.msra.mxu0 0.0
    %343 = vmatpush.msra.mxu0 0.0
    %344 = vmatpush.msra.mxu0 %v160
    %345 = vmatpush.msra.mxu0 %v159
    %346 = vmatpush.msra.mxu0 %v158
    %347 = vmatpush.msra.mxu0 %v157
    %348 = vmatmul.f32.gmra.mxu0 %v330
    %v349 = vpop.f32.mrf.mxu0
    %v350 = vadd.f32 0.0, %v349
    %351 = vdwg.mxu0
    %v353 = vrot.slane %v350, 4
    %v355 = vadd.f32 %v190, %v353
    %v356 = vxor.u32 %v355, 2147483648
    %v357 = vmul.f32 %v356, 1.442695
    %v358 = vpow.pop %v357
    %v359 = vadd.f32 %v358, 1.0
    %v360 = vrcp.pop %v359
    %v361 = vmul.f32 %v359, %v360
    %v362 = vsub.f32 1.0, %v361
    %v363 = vmul.f32 %v360, %v362
    %v364 = vadd.f32 %v360, %v363
    %vm365 = vweird.f32 %v359
    %vm366 = vweird.f32 %v360
    %vm367 = vmor %vm365, %vm366
    %v368 = vsel %vm367, %v360, %v364
    %v369 = vand.u32 2147483647, %v359
    %vm370 = vcmp.eq.f32.partialorder %v369, 8.507059e+37
    %v371 = vand.u32 %v359, 2147483648
    %v372 = vor.u32 1.1754944e-38, %v371
    %v373 = vsel %vm370, %v372, %v368
    %v374 = vmul.f32 1.0, %v373
    %v375 = vtanh.pop %v355
    %v377 = vrot.slane %v319, 6
    %v379 = vmul.f32 %v374, %v377
    %381 = vrot.lane.b32.xlu0 %v375, 64
    %v382 = vpop.permute.xlu0 %381
    %v384 = vmul.f32 %v374, %v382
    %386 = vrot.lane.b32.xlu0 %v384, 32
    %v387 = vpop.permute.xlu0 %386
    %v389 = vadd.f32 %v379, %v387
    %v390 = vtanh.pop %v389
    %392 = vrot.lane.b32.xlu0 %v390, 64
    %v393 = vpop.permute.xlu0 %392
    %v395 = vmul.f32 %v374, %v393
    %v397 = vrot.slane %v395, 4
    %398 = vrot.lane.b32.xlu0 %v397, 32
    %v399 = vpop.permute.xlu0 %398
    %v400 = vsel %vm195, %v399, 0
    %402 = vmatpush.msra.mxu0 0.0
    %403 = vmatpush.msra.mxu0 0.0
    %404 = vmatpush.msra.mxu0 0.0
    %405 = vmatpush.msra.mxu0 0.0
    %406 = vmatpush.msra.mxu0 0.0
    %407 = vmatpush.msra.mxu0 0.0
    %408 = vmatpush.msra.mxu0 0.0
    %409 = vmatpush.msra.mxu0 0.0
    %410 = vmatpush.msra.mxu0 0.0
    %411 = vmatpush.msra.mxu0 0.0
    %412 = vmatpush.msra.mxu0 0.0
    %413 = vmatpush.msra.mxu0 0.0
    %414 = vmatpush.msra.mxu0 %v160
    %415 = vmatpush.msra.mxu0 %v159
    %416 = vmatpush.msra.mxu0 %v158
    %417 = vmatpush.msra.mxu0 %v157
    %418 = vmatmul.f32.gmra.mxu0 %v400
    %v419 = vpop.f32.mrf.mxu0
    %v420 = vadd.f32 0.0, %v419
    %421 = vdwg.mxu0
    %v423 = vrot.slane %v420, 2
    %v425 = vadd.f32 %v190, %v423
    %v426 = vxor.u32 %v425, 2147483648
    %v427 = vmul.f32 %v426, 1.442695
    %v428 = vpow.pop %v427
    %v429 = vadd.f32 %v428, 1.0
    %v430 = vrcp.pop %v429
    %v431 = vmul.f32 %v429, %v430
    %v432 = vsub.f32 1.0, %v431
    %v433 = vmul.f32 %v430, %v432
    %v434 = vadd.f32 %v430, %v433
    %vm435 = vweird.f32 %v429
    %vm436 = vweird.f32 %v430
    %vm437 = vmor %vm435, %vm436
    %v438 = vsel %vm437, %v430, %v434
    %v439 = vand.u32 2147483647, %v429
    %vm440 = vcmp.eq.f32.partialorder %v439, 8.507059e+37
    %v441 = vand.u32 %v429, 2147483648
    %v442 = vor.u32 1.1754944e-38, %v441
    %v443 = vsel %vm440, %v442, %v438
    %v444 = vmul.f32 1.0, %v443
    %v445 = vtanh.pop %v425
    %v447 = vrot.slane %v389, 6
    %v449 = vmul.f32 %v444, %v447
    %451 = vrot.lane.b32.xlu0 %v445, 64
    %v452 = vpop.permute.xlu0 %451
    %v454 = vmul.f32 %v444, %v452
    %456 = vrot.lane.b32.xlu0 %v454, 32
    %v457 = vpop.permute.xlu0 %456
    %v459 = vadd.f32 %v449, %v457
    %v460 = vtanh.pop %v459
    %462 = vrot.lane.b32.xlu0 %v460, 64
    %v463 = vpop.permute.xlu0 %462
    %v465 = vmul.f32 %v444, %v463
    %v467 = vrot.slane %v465, 6
    %468 = vrot.lane.b32.xlu0 %v467, 32
    %v469 = vpop.permute.xlu0 %468
    %v470 = vsel %vm195, %v469, 0
    %472 = vmatpush.msra.mxu0 0.0
    %473 = vmatpush.msra.mxu0 0.0
    %474 = vmatpush.msra.mxu0 0.0
    %475 = vmatpush.msra.mxu0 0.0
    %476 = vmatpush.msra.mxu0 0.0
    %477 = vmatpush.msra.mxu0 0.0
    %478 = vmatpush.msra.mxu0 0.0
    %479 = vmatpush.msra.mxu0 0.0
    %480 = vmatpush.msra.mxu0 0.0
    %481 = vmatpush.msra.mxu0 0.0
    %482 = vmatpush.msra.mxu0 0.0
    %483 = vmatpush.msra.mxu0 0.0
    %484 = vmatpush.msra.mxu0 %v160
    %485 = vmatpush.msra.mxu0 %v159
    %486 = vmatpush.msra.mxu0 %v158
    %487 = vmatpush.msra.mxu0 %v157
    %488 = vmatmul.f32.gmra.mxu0 %v470
    %v489 = vpop.f32.mrf.mxu0
    %v490 = vadd.f32 0.0, %v489
    %491 = vdwg.mxu0
    %v492 = vadd.f32 %v193, %v490
    %v493 = vxor.u32 %v492, 2147483648
    %v494 = vmul.f32 %v493, 1.442695
    %v495 = vpow.pop %v494
    %v496 = vadd.f32 %v495, 1.0
    %v497 = vrcp.pop %v496
    %v498 = vmul.f32 %v496, %v497
    %v499 = vsub.f32 1.0, %v498
    %v500 = vmul.f32 %v497, %v499
    %v501 = vadd.f32 %v497, %v500
    %vm502 = vweird.f32 %v496
    %vm503 = vweird.f32 %v497
    %vm504 = vmor %vm502, %vm503
    %v505 = vsel %vm504, %v497, %v501
    %v506 = vand.u32 2147483647, %v496
    %vm507 = vcmp.eq.f32.partialorder %v506, 8.507059e+37
    %v508 = vand.u32 %v496, 2147483648
    %v509 = vor.u32 1.1754944e-38, %v508
    %v510 = vsel %vm507, %v509, %v505
    %v511 = vmul.f32 1.0, %v510
    %v512 = vtanh.pop %v492
    %v514 = vrot.slane %v459, 6
    %v516 = vmul.f32 %v511, %v514
    %518 = vrot.lane.b32.xlu0 %v512, 64
    %v519 = vpop.permute.xlu0 %518
    %v521 = vmul.f32 %v511, %v519
    %523 = vrot.lane.b32.xlu0 %v521, 32
    %v524 = vpop.permute.xlu0 %523
    %v526 = vadd.f32 %v516, %v524
    %v527 = vtanh.pop %v526
    %529 = vrot.lane.b32.xlu0 %v527, 64
    %v530 = vpop.permute.xlu0 %529
    %v532 = vmul.f32 %v511, %v530
    %534 = vrot.lane.b32.xlu0 %v532, 32
    %v535 = vpop.permute.xlu0 %534
    %v536 = vsel %vm195, %v535, 0
    %538 = vmatpush.msra.mxu0 0.0
    %539 = vmatpush.msra.mxu0 0.0
    %540 = vmatpush.msra.mxu0 0.0
    %541 = vmatpush.msra.mxu0 0.0
    %542 = vmatpush.msra.mxu0 0.0
    %543 = vmatpush.msra.mxu0 0.0
    %544 = vmatpush.msra.mxu0 0.0
    %545 = vmatpush.msra.mxu0 0.0
    %546 = vmatpush.msra.mxu0 0.0
    %547 = vmatpush.msra.mxu0 0.0
    %548 = vmatpush.msra.mxu0 0.0
    %549 = vmatpush.msra.mxu0 0.0
    %550 = vmatpush.msra.mxu0 %v160
    %551 = vmatpush.msra.mxu0 %v159
    %552 = vmatpush.msra.mxu0 %v158
    %553 = vmatpush.msra.mxu0 %v157
    %554 = vmatmul.f32.gmra.mxu0 %v536
    %v555 = vpop.f32.mrf.mxu0
    %v556 = vadd.f32 0.0, %v555
    %557 = vdwg.mxu0
    %v559 = vrot.slane %v556, 6
    %v561 = vadd.f32 %v193, %v559
    %v562 = vxor.u32 %v561, 2147483648
    %v563 = vmul.f32 %v562, 1.442695
    %v564 = vpow.pop %v563
    %v565 = vadd.f32 %v564, 1.0
    %v566 = vrcp.pop %v565
    %v567 = vmul.f32 %v565, %v566
    %v568 = vsub.f32 1.0, %v567
    %v569 = vmul.f32 %v566, %v568
    %v570 = vadd.f32 %v566, %v569
    %vm571 = vweird.f32 %v565
    %vm572 = vweird.f32 %v566
    %vm573 = vmor %vm571, %vm572
    %v574 = vsel %vm573, %v566, %v570
    %v575 = vand.u32 2147483647, %v565
    %vm576 = vcmp.eq.f32.partialorder %v575, 8.507059e+37
    %v577 = vand.u32 %v565, 2147483648
    %v578 = vor.u32 1.1754944e-38, %v577
    %v579 = vsel %vm576, %v578, %v574
    %v580 = vmul.f32 1.0, %v579
    %v581 = vtanh.pop %v561
    %v583 = vrot.slane %v526, 6
    %v585 = vmul.f32 %v580, %v583
    %587 = vrot.lane.b32.xlu0 %v581, 64
    %v588 = vpop.permute.xlu0 %587
    %v590 = vmul.f32 %v580, %v588
    %592 = vrot.lane.b32.xlu0 %v590, 32
    %v593 = vpop.permute.xlu0 %592
    %v595 = vadd.f32 %v585, %v593
    %v596 = vtanh.pop %v595
    %598 = vrot.lane.b32.xlu0 %v596, 64
    %v599 = vpop.permute.xlu0 %598
    %v601 = vmul.f32 %v580, %v599
    %v603 = vrot.slane %v601, 2
    %604 = vrot.lane.b32.xlu0 %v603, 32
    %v605 = vpop.permute.xlu0 %604
    %v606 = vsel %vm195, %v605, 0
    %608 = vmatpush.msra.mxu0 0.0
    %609 = vmatpush.msra.mxu0 0.0
    %610 = vmatpush.msra.mxu0 0.0
    %611 = vmatpush.msra.mxu0 0.0
    %612 = vmatpush.msra.mxu0 0.0
    %613 = vmatpush.msra.mxu0 0.0
    %614 = vmatpush.msra.mxu0 0.0
    %615 = vmatpush.msra.mxu0 0.0
    %616 = vmatpush.msra.mxu0 0.0
    %617 = vmatpush.msra.mxu0 0.0
    %618 = vmatpush.msra.mxu0 0.0
    %619 = vmatpush.msra.mxu0 0.0
    %620 = vmatpush.msra.mxu0 %v160
    %621 = vmatpush.msra.mxu0 %v159
    %622 = vmatpush.msra.mxu0 %v158
    %623 = vmatpush.msra.mxu0 %v157
    %624 = vmatmul.f32.gmra.mxu0 %v606
    %v625 = vpop.f32.mrf.mxu0
    %v626 = vadd.f32 0.0, %v625
    %627 = vdwg.mxu0
    %v629 = vrot.slane %v626, 4
    %v631 = vadd.f32 %v193, %v629
    %v632 = vxor.u32 %v631, 2147483648
    %v633 = vmul.f32 %v632, 1.442695
    %v634 = vpow.pop %v633
    %v635 = vadd.f32 %v634, 1.0
    %v636 = vrcp.pop %v635
    %v637 = vmul.f32 %v635, %v636
    %v638 = vsub.f32 1.0, %v637
    %v639 = vmul.f32 %v636, %v638
    %v640 = vadd.f32 %v636, %v639
    %vm641 = vweird.f32 %v635
    %vm642 = vweird.f32 %v636
    %vm643 = vmor %vm641, %vm642
    %v644 = vsel %vm643, %v636, %v640
    %v645 = vand.u32 2147483647, %v635
    %vm646 = vcmp.eq.f32.partialorder %v645, 8.507059e+37
    %v647 = vand.u32 %v635, 2147483648
    %v648 = vor.u32 1.1754944e-38, %v647
    %v649 = vsel %vm646, %v648, %v644
    %v650 = vmul.f32 1.0, %v649
    %v651 = vtanh.pop %v631
    %v653 = vrot.slane %v595, 6
    %v655 = vmul.f32 %v650, %v653
    %657 = vrot.lane.b32.xlu0 %v651, 64
    %v658 = vpop.permute.xlu0 %657
    %v660 = vmul.f32 %v650, %v658
    %662 = vrot.lane.b32.xlu0 %v660, 32
    %v663 = vpop.permute.xlu0 %662
    %v665 = vadd.f32 %v655, %v663
    %v666 = vtanh.pop %v665
    %668 = vrot.lane.b32.xlu0 %v666, 64
    %v669 = vpop.permute.xlu0 %668
    %v671 = vmul.f32 %v650, %v669
    %v673 = vrot.slane %v671, 4
    %674 = vrot.lane.b32.xlu0 %v673, 32
    %v675 = vpop.permute.xlu0 %674
    %v676 = vsel %vm195, %v675, 0
    %678 = vmatpush.msra.mxu0 0.0
    %679 = vmatpush.msra.mxu0 0.0
    %680 = vmatpush.msra.mxu0 0.0
    %681 = vmatpush.msra.mxu0 0.0
    %682 = vmatpush.msra.mxu0 0.0
    %683 = vmatpush.msra.mxu0 0.0
    %684 = vmatpush.msra.mxu0 0.0
    %685 = vmatpush.msra.mxu0 0.0
    %686 = vmatpush.msra.mxu0 0.0
    %687 = vmatpush.msra.mxu0 0.0
    %688 = vmatpush.msra.mxu0 0.0
    %689 = vmatpush.msra.mxu0 0.0
    %690 = vmatpush.msra.mxu0 %v160
    %691 = vmatpush.msra.mxu0 %v159
    %692 = vmatpush.msra.mxu0 %v158
    %693 = vmatpush.msra.mxu0 %v157
    %694 = vmatmul.f32.gmra.mxu0 %v676
    %v695 = vpop.f32.mrf.mxu0
    %v696 = vadd.f32 0.0, %v695
    %697 = vdwg.mxu0
    %v699 = vrot.slane %v696, 2
    %v701 = vadd.f32 %v193, %v699
    %v702 = vxor.u32 %v701, 2147483648
    %v703 = vmul.f32 %v702, 1.442695
    %v704 = vpow.pop %v703
    %v705 = vadd.f32 %v704, 1.0
    %v706 = vrcp.pop %v705
    %v707 = vmul.f32 %v705, %v706
    %v708 = vsub.f32 1.0, %v707
    %v709 = vmul.f32 %v706, %v708
    %v710 = vadd.f32 %v706, %v709
    %vm711 = vweird.f32 %v705
    %vm712 = vweird.f32 %v706
    %vm713 = vmor %vm711, %vm712
    %v714 = vsel %vm713, %v706, %v710
    %v715 = vand.u32 2147483647, %v705
    %vm716 = vcmp.eq.f32.partialorder %v715, 8.507059e+37
    %v717 = vand.u32 %v705, 2147483648
    %v718 = vor.u32 1.1754944e-38, %v717
    %v719 = vsel %vm716, %v718, %v714
    %v720 = vmul.f32 1.0, %v719
    %v721 = vtanh.pop %v701
    %v723 = vrot.slane %v665, 6
    %v725 = vmul.f32 %v720, %v723
    %727 = vrot.lane.b32.xlu0 %v721, 64
    %v728 = vpop.permute.xlu0 %727
    %v730 = vmul.f32 %v720, %v728
    %732 = vrot.lane.b32.xlu0 %v730, 32
    %v733 = vpop.permute.xlu0 %732
    %v735 = vadd.f32 %v725, %v733
    %v736 = vtanh.pop %v735
    %738 = vrot.lane.b32.xlu0 %v736, 64
    %v739 = vpop.permute.xlu0 %738
    %v741 = vmul.f32 %v720, %v739
    %v742 = vsel %vm147, %v256, %v325
    %v743 = vsel %vm149, %v742, %v395
    %v744 = vsel %vm151, %v743, %v465
    %v745 = vsel %vm147, %v532, %v601
    %v746 = vsel %vm149, %v745, %v671
    %v747 = vsel %vm151, %v746, %v741
    %v748 = vld [vmem:[%s4] sm:$0xff]
    %v749 = vld [vmem:[%s4 + $0x8] sm:$0xff]
    %v750 = vld [vmem:[%s4 + $0x10] sm:$0xff]
    %v751 = vld [vmem:[%s4 + $0x18] sm:$0xff]
    %v752 = vld [vmem:[%s5] sm:$0xff]
    %v753 = vld [vmem:[%s5 + $0x8] sm:$0xff]
    %v754 = vld [vmem:[%s5 + $0x10] sm:$0xff]
    %v755 = vld [vmem:[%s5 + $0x18] sm:$0xff]
    %v756 = vld [vmem:[#allocation7] sm:$0x1]
    %v758 = vperm.slane %v756, 0
    %762 = vrot.lane.b32.xlu0 %v744, 32
    %v763 = vpop.permute.xlu0 %762
    %764 = vrot.lane.b32.xlu0 %v747, 32
    %v765 = vpop.permute.xlu0 %764
    %v766 = vsel %vm195, %v763, 0
    %v768 = vsel %vm195, %v765, 0
    %770 = vmatpush.msra.mxu0 0.0
    %771 = vmatpush.msra.mxu0 0.0
    %772 = vmatpush.msra.mxu0 0.0
    %773 = vmatpush.msra.mxu0 0.0
    %774 = vmatpush.msra.mxu0 0.0
    %775 = vmatpush.msra.mxu0 0.0
    %776 = vmatpush.msra.mxu0 0.0
    %777 = vmatpush.msra.mxu0 0.0
    %778 = vmatpush.msra.mxu0 0.0
    %779 = vmatpush.msra.mxu0 0.0
    %780 = vmatpush.msra.mxu0 0.0
    %781 = vmatpush.msra.mxu0 0.0
    %782 = vmatpush.msra.mxu0 %v751
    %783 = vmatpush.msra.mxu0 %v750
    %784 = vmatpush.msra.mxu0 %v749
    %785 = vmatpush.msra.mxu0 %v748
    %786 = vmatmul.f32.gmra.mxu0 %v766
    %v787 = vpop.f32.mrf.mxu0
    %v788 = vadd.f32 %v758, %v787
    %789 = vmatmul.f32.gmra.mxu0 %v768
    %v790 = vpop.f32.mrf.mxu0
    %v791 = vadd.f32 %v758, %v790
    %792 = vdwg.mxu0
    %793 = vmatpush.msra.mxu0 0.0
    %794 = vmatpush.msra.mxu0 0.0
    %795 = vmatpush.msra.mxu0 0.0
    %796 = vmatpush.msra.mxu0 0.0
    %797 = vmatpush.msra.mxu0 0.0
    %798 = vmatpush.msra.mxu0 0.0
    %799 = vmatpush.msra.mxu0 0.0
    %800 = vmatpush.msra.mxu0 0.0
    %801 = vmatpush.msra.mxu0 0.0
    %802 = vmatpush.msra.mxu0 0.0
    %803 = vmatpush.msra.mxu0 0.0
    %804 = vmatpush.msra.mxu0 0.0
    %805 = vmatpush.msra.mxu0 %v755
    %806 = vmatpush.msra.mxu0 %v754
    %807 = vmatpush.msra.mxu0 %v753
    %808 = vmatpush.msra.mxu0 %v752
    %809 = vmatmul.f32.gmra.mxu0 %v197
    %v810 = vpop.f32.mrf.mxu0
    %v811 = vadd.f32 0.0, %v810
    %812 = vdwg.mxu0
    %v813 = vadd.f32 %v788, %v811
    %v814 = vxor.u32 %v813, 2147483648
    %v815 = vmul.f32 %v814, 1.442695
    %v816 = vpow.pop %v815
    %v817 = vadd.f32 %v816, 1.0
    %v818 = vrcp.pop %v817
    %v819 = vmul.f32 %v817, %v818
    %v820 = vsub.f32 1.0, %v819
    %v821 = vmul.f32 %v818, %v820
    %v822 = vadd.f32 %v818, %v821
    %vm823 = vweird.f32 %v817
    %vm824 = vweird.f32 %v818
    %vm825 = vmor %vm823, %vm824
    %v826 = vsel %vm825, %v818, %v822
    %v827 = vand.u32 2147483647, %v817
    %vm828 = vcmp.eq.f32.partialorder %v827, 8.507059e+37
    %v829 = vand.u32 %v817, 2147483648
    %v830 = vor.u32 1.1754944e-38, %v829
    %v831 = vsel %vm828, %v830, %v826
    %v832 = vmul.f32 1.0, %v831
    %v833 = vtanh.pop %v813
    %v834 = vmul.f32 %v832, 0.0
    %836 = vrot.lane.b32.xlu0 %v833, 64
    %v837 = vpop.permute.xlu0 %836
    %v839 = vmul.f32 %v832, %v837
    %841 = vrot.lane.b32.xlu0 %v839, 32
    %v842 = vpop.permute.xlu0 %841
    %v844 = vadd.f32 %v834, %v842
    %v845 = vtanh.pop %v844
    %847 = vrot.lane.b32.xlu0 %v845, 64
    %v848 = vpop.permute.xlu0 %847
    %v850 = vmul.f32 %v832, %v848
    %852 = vrot.lane.b32.xlu0 %v850, 32
    %v853 = vpop.permute.xlu0 %852
    %v854 = vsel %vm195, %v853, 0
    %856 = vmatpush.msra.mxu0 0.0
    %857 = vmatpush.msra.mxu0 0.0
    %858 = vmatpush.msra.mxu0 0.0
    %859 = vmatpush.msra.mxu0 0.0
    %860 = vmatpush.msra.mxu0 0.0
    %861 = vmatpush.msra.mxu0 0.0
    %862 = vmatpush.msra.mxu0 0.0
    %863 = vmatpush.msra.mxu0 0.0
    %864 = vmatpush.msra.mxu0 0.0
    %865 = vmatpush.msra.mxu0 0.0
    %866 = vmatpush.msra.mxu0 0.0
    %867 = vmatpush.msra.mxu0 0.0
    %868 = vmatpush.msra.mxu0 %v755
    %869 = vmatpush.msra.mxu0 %v754
    %870 = vmatpush.msra.mxu0 %v753
    %871 = vmatpush.msra.mxu0 %v752
    %872 = vmatmul.f32.gmra.mxu0 %v854
    %v873 = vpop.f32.mrf.mxu0
    %v874 = vadd.f32 0.0, %v873
    %875 = vdwg.mxu0
    %v877 = vrot.slane %v874, 6
    %v879 = vadd.f32 %v788, %v877
    %v880 = vxor.u32 %v879, 2147483648
    %v881 = vmul.f32 %v880, 1.442695
    %v882 = vpow.pop %v881
    %v883 = vadd.f32 %v882, 1.0
    %v884 = vrcp.pop %v883
    %v885 = vmul.f32 %v883, %v884
    %v886 = vsub.f32 1.0, %v885
    %v887 = vmul.f32 %v884, %v886
    %v888 = vadd.f32 %v884, %v887
    %vm889 = vweird.f32 %v883
    %vm890 = vweird.f32 %v884
    %vm891 = vmor %vm889, %vm890
    %v892 = vsel %vm891, %v884, %v888
    %v893 = vand.u32 2147483647, %v883
    %vm894 = vcmp.eq.f32.partialorder %v893, 8.507059e+37
    %v895 = vand.u32 %v883, 2147483648
    %v896 = vor.u32 1.1754944e-38, %v895
    %v897 = vsel %vm894, %v896, %v892
    %v898 = vmul.f32 1.0, %v897
    %v899 = vtanh.pop %v879
    %v901 = vrot.slane %v844, 6
    %v903 = vmul.f32 %v898, %v901
    %905 = vrot.lane.b32.xlu0 %v899, 64
    %v906 = vpop.permute.xlu0 %905
    %v908 = vmul.f32 %v898, %v906
    %910 = vrot.lane.b32.xlu0 %v908, 32
    %v911 = vpop.permute.xlu0 %910
    %v913 = vadd.f32 %v903, %v911
    %v914 = vtanh.pop %v913
    %916 = vrot.lane.b32.xlu0 %v914, 64
    %v917 = vpop.permute.xlu0 %916
    %v919 = vmul.f32 %v898, %v917
    %v921 = vrot.slane %v919, 2
    %922 = vrot.lane.b32.xlu0 %v921, 32
    %v923 = vpop.permute.xlu0 %922
    %v924 = vsel %vm195, %v923, 0
    %926 = vmatpush.msra.mxu0 0.0
    %927 = vmatpush.msra.mxu0 0.0
    %928 = vmatpush.msra.mxu0 0.0
    %929 = vmatpush.msra.mxu0 0.0
    %930 = vmatpush.msra.mxu0 0.0
    %931 = vmatpush.msra.mxu0 0.0
    %932 = vmatpush.msra.mxu0 0.0
    %933 = vmatpush.msra.mxu0 0.0
    %934 = vmatpush.msra.mxu0 0.0
    %935 = vmatpush.msra.mxu0 0.0
    %936 = vmatpush.msra.mxu0 0.0
    %937 = vmatpush.msra.mxu0 0.0
    %938 = vmatpush.msra.mxu0 %v755
    %939 = vmatpush.msra.mxu0 %v754
    %940 = vmatpush.msra.mxu0 %v753
    %941 = vmatpush.msra.mxu0 %v752
    %942 = vmatmul.f32.gmra.mxu0 %v924
    %v943 = vpop.f32.mrf.mxu0
    %v944 = vadd.f32 0.0, %v943
    %945 = vdwg.mxu0
    %v947 = vrot.slane %v944, 4
    %v949 = vadd.f32 %v788, %v947
    %v950 = vxor.u32 %v949, 2147483648
    %v951 = vmul.f32 %v950, 1.442695
    %v952 = vpow.pop %v951
    %v953 = vadd.f32 %v952, 1.0
    %v954 = vrcp.pop %v953
    %v955 = vmul.f32 %v953, %v954
    %v956 = vsub.f32 1.0, %v955
    %v957 = vmul.f32 %v954, %v956
    %v958 = vadd.f32 %v954, %v957
    %vm959 = vweird.f32 %v953
    %vm960 = vweird.f32 %v954
    %vm961 = vmor %vm959, %vm960
    %v962 = vsel %vm961, %v954, %v958
    %v963 = vand.u32 2147483647, %v953
    %vm964 = vcmp.eq.f32.partialorder %v963, 8.507059e+37
    %v965 = vand.u32 %v953, 2147483648
    %v966 = vor.u32 1.1754944e-38, %v965
    %v967 = vsel %vm964, %v966, %v962
    %v968 = vmul.f32 1.0, %v967
    %v969 = vtanh.pop %v949
    %v971 = vrot.slane %v913, 6
    %v973 = vmul.f32 %v968, %v971
    %975 = vrot.lane.b32.xlu0 %v969, 64
    %v976 = vpop.permute.xlu0 %975
    %v978 = vmul.f32 %v968, %v976
    %980 = vrot.lane.b32.xlu0 %v978, 32
    %v981 = vpop.permute.xlu0 %980
    %v983 = vadd.f32 %v973, %v981
    %v984 = vtanh.pop %v983
    %986 = vrot.lane.b32.xlu0 %v984, 64
    %v987 = vpop.permute.xlu0 %986
    %v989 = vmul.f32 %v968, %v987
    %v991 = vrot.slane %v989, 4
    %992 = vrot.lane.b32.xlu0 %v991, 32
    %v993 = vpop.permute.xlu0 %992
    %v994 = vsel %vm195, %v993, 0
    %996 = vmatpush.msra.mxu0 0.0
    %997 = vmatpush.msra.mxu0 0.0
    %998 = vmatpush.msra.mxu0 0.0
    %999 = vmatpush.msra.mxu0 0.0
    %1000 = vmatpush.msra.mxu0 0.0
    %1001 = vmatpush.msra.mxu0 0.0
    %1002 = vmatpush.msra.mxu0 0.0
    %1003 = vmatpush.msra.mxu0 0.0
    %1004 = vmatpush.msra.mxu0 0.0
    %1005 = vmatpush.msra.mxu0 0.0
    %1006 = vmatpush.msra.mxu0 0.0
    %1007 = vmatpush.msra.mxu0 0.0
    %1008 = vmatpush.msra.mxu0 %v755
    %1009 = vmatpush.msra.mxu0 %v754
    %1010 = vmatpush.msra.mxu0 %v753
    %1011 = vmatpush.msra.mxu0 %v752
    %1012 = vmatmul.f32.gmra.mxu0 %v994
    %v1013 = vpop.f32.mrf.mxu0
    %v1014 = vadd.f32 0.0, %v1013
    %1015 = vdwg.mxu0
    %v1017 = vrot.slane %v1014, 2
    %v1019 = vadd.f32 %v788, %v1017
    %v1020 = vxor.u32 %v1019, 2147483648
    %v1021 = vmul.f32 %v1020, 1.442695
    %v1022 = vpow.pop %v1021
    %v1023 = vadd.f32 %v1022, 1.0
    %v1024 = vrcp.pop %v1023
    %v1025 = vmul.f32 %v1023, %v1024
    %v1026 = vsub.f32 1.0, %v1025
    %v1027 = vmul.f32 %v1024, %v1026
    %v1028 = vadd.f32 %v1024, %v1027
    %vm1029 = vweird.f32 %v1023
    %vm1030 = vweird.f32 %v1024
    %vm1031 = vmor %vm1029, %vm1030
    %v1032 = vsel %vm1031, %v1024, %v1028
    %v1033 = vand.u32 2147483647, %v1023
    %vm1034 = vcmp.eq.f32.partialorder %v1033, 8.507059e+37
    %v1035 = vand.u32 %v1023, 2147483648
    %v1036 = vor.u32 1.1754944e-38, %v1035
    %v1037 = vsel %vm1034, %v1036, %v1032
    %v1038 = vmul.f32 1.0, %v1037
    %v1039 = vtanh.pop %v1019
    %v1041 = vrot.slane %v983, 6
    %v1043 = vmul.f32 %v1038, %v1041
    %1045 = vrot.lane.b32.xlu0 %v1039, 64
    %v1046 = vpop.permute.xlu0 %1045
    %v1048 = vmul.f32 %v1038, %v1046
    %1050 = vrot.lane.b32.xlu0 %v1048, 32
    %v1051 = vpop.permute.xlu0 %1050
    %v1053 = vadd.f32 %v1043, %v1051
    %v1054 = vtanh.pop %v1053
    %1056 = vrot.lane.b32.xlu0 %v1054, 64
    %v1057 = vpop.permute.xlu0 %1056
    %v1059 = vmul.f32 %v1038, %v1057
    %v1061 = vrot.slane %v1059, 6
    %1062 = vrot.lane.b32.xlu0 %v1061, 32
    %v1063 = vpop.permute.xlu0 %1062
    %v1064 = vsel %vm195, %v1063, 0
    %1066 = vmatpush.msra.mxu0 0.0
    %1067 = vmatpush.msra.mxu0 0.0
    %1068 = vmatpush.msra.mxu0 0.0
    %1069 = vmatpush.msra.mxu0 0.0
    %1070 = vmatpush.msra.mxu0 0.0
    %1071 = vmatpush.msra.mxu0 0.0
    %1072 = vmatpush.msra.mxu0 0.0
    %1073 = vmatpush.msra.mxu0 0.0
    %1074 = vmatpush.msra.mxu0 0.0
    %1075 = vmatpush.msra.mxu0 0.0
    %1076 = vmatpush.msra.mxu0 0.0
    %1077 = vmatpush.msra.mxu0 0.0
    %1078 = vmatpush.msra.mxu0 %v755
    %1079 = vmatpush.msra.mxu0 %v754
    %1080 = vmatpush.msra.mxu0 %v753
    %1081 = vmatpush.msra.mxu0 %v752
    %1082 = vmatmul.f32.gmra.mxu0 %v1064
    %v1083 = vpop.f32.mrf.mxu0
    %v1084 = vadd.f32 0.0, %v1083
    %1085 = vdwg.mxu0
    %v1086 = vadd.f32 %v791, %v1084
    %v1087 = vxor.u32 %v1086, 2147483648
    %v1088 = vmul.f32 %v1087, 1.442695
    %v1089 = vpow.pop %v1088
    %v1090 = vadd.f32 %v1089, 1.0
    %v1091 = vrcp.pop %v1090
    %v1092 = vmul.f32 %v1090, %v1091
    %v1093 = vsub.f32 1.0, %v1092
    %v1094 = vmul.f32 %v1091, %v1093
    %v1095 = vadd.f32 %v1091, %v1094
    %vm1096 = vweird.f32 %v1090
    %vm1097 = vweird.f32 %v1091
    %vm1098 = vmor %vm1096, %vm1097
    %v1099 = vsel %vm1098, %v1091, %v1095
    %v1100 = vand.u32 2147483647, %v1090
    %vm1101 = vcmp.eq.f32.partialorder %v1100, 8.507059e+37
    %v1102 = vand.u32 %v1090, 2147483648
    %v1103 = vor.u32 1.1754944e-38, %v1102
    %v1104 = vsel %vm1101, %v1103, %v1099
    %v1105 = vmul.f32 1.0, %v1104
    %v1106 = vtanh.pop %v1086
    %v1108 = vrot.slane %v1053, 6
    %v1110 = vmul.f32 %v1105, %v1108
    %1112 = vrot.lane.b32.xlu0 %v1106, 64
    %v1113 = vpop.permute.xlu0 %1112
    %v1115 = vmul.f32 %v1105, %v1113
    %1117 = vrot.lane.b32.xlu0 %v1115, 32
    %v1118 = vpop.permute.xlu0 %1117
    %v1120 = vadd.f32 %v1110, %v1118
    %v1121 = vtanh.pop %v1120
    %1123 = vrot.lane.b32.xlu0 %v1121, 64
    %v1124 = vpop.permute.xlu0 %1123
    %v1126 = vmul.f32 %v1105, %v1124
    %1128 = vrot.lane.b32.xlu0 %v1126, 32
    %v1129 = vpop.permute.xlu0 %1128
    %v1130 = vsel %vm195, %v1129, 0
    %1132 = vmatpush.msra.mxu0 0.0
    %1133 = vmatpush.msra.mxu0 0.0
    %1134 = vmatpush.msra.mxu0 0.0
    %1135 = vmatpush.msra.mxu0 0.0
    %1136 = vmatpush.msra.mxu0 0.0
    %1137 = vmatpush.msra.mxu0 0.0
    %1138 = vmatpush.msra.mxu0 0.0
    %1139 = vmatpush.msra.mxu0 0.0
    %1140 = vmatpush.msra.mxu0 0.0
    %1141 = vmatpush.msra.mxu0 0.0
    %1142 = vmatpush.msra.mxu0 0.0
    %1143 = vmatpush.msra.mxu0 0.0
    %1144 = vmatpush.msra.mxu0 %v755
    %1145 = vmatpush.msra.mxu0 %v754
    %1146 = vmatpush.msra.mxu0 %v753
    %1147 = vmatpush.msra.mxu0 %v752
    %1148 = vmatmul.f32.gmra.mxu0 %v1130
    %v1149 = vpop.f32.mrf.mxu0
    %v1150 = vadd.f32 0.0, %v1149
    %1151 = vdwg.mxu0
    %v1153 = vrot.slane %v1150, 6
    %v1155 = vadd.f32 %v791, %v1153
    %v1156 = vxor.u32 %v1155, 2147483648
    %v1157 = vmul.f32 %v1156, 1.442695
    %v1158 = vpow.pop %v1157
    %v1159 = vadd.f32 %v1158, 1.0
    %v1160 = vrcp.pop %v1159
    %v1161 = vmul.f32 %v1159, %v1160
    %v1162 = vsub.f32 1.0, %v1161
    %v1163 = vmul.f32 %v1160, %v1162
    %v1164 = vadd.f32 %v1160, %v1163
    %vm1165 = vweird.f32 %v1159
    %vm1166 = vweird.f32 %v1160
    %vm1167 = vmor %vm1165, %vm1166
    %v1168 = vsel %vm1167, %v1160, %v1164
    %v1169 = vand.u32 2147483647, %v1159
    %vm1170 = vcmp.eq.f32.partialorder %v1169, 8.507059e+37
    %v1171 = vand.u32 %v1159, 2147483648
    %v1172 = vor.u32 1.1754944e-38, %v1171
    %v1173 = vsel %vm1170, %v1172, %v1168
    %v1174 = vmul.f32 1.0, %v1173
    %v1175 = vtanh.pop %v1155
    %v1177 = vrot.slane %v1120, 6
    %v1179 = vmul.f32 %v1174, %v1177
    %1181 = vrot.lane.b32.xlu0 %v1175, 64
    %v1182 = vpop.permute.xlu0 %1181
    %v1184 = vmul.f32 %v1174, %v1182
    %1186 = vrot.lane.b32.xlu0 %v1184, 32
    %v1187 = vpop.permute.xlu0 %1186
    %v1189 = vadd.f32 %v1179, %v1187
    %v1190 = vtanh.pop %v1189
    %1192 = vrot.lane.b32.xlu0 %v1190, 64
    %v1193 = vpop.permute.xlu0 %1192
    %v1195 = vmul.f32 %v1174, %v1193
    %v1197 = vrot.slane %v1195, 2
    %1198 = vrot.lane.b32.xlu0 %v1197, 32
    %v1199 = vpop.permute.xlu0 %1198
    %v1200 = vsel %vm195, %v1199, 0
    %1202 = vmatpush.msra.mxu0 0.0
    %1203 = vmatpush.msra.mxu0 0.0
    %1204 = vmatpush.msra.mxu0 0.0
    %1205 = vmatpush.msra.mxu0 0.0
    %1206 = vmatpush.msra.mxu0 0.0
    %1207 = vmatpush.msra.mxu0 0.0
    %1208 = vmatpush.msra.mxu0 0.0
    %1209 = vmatpush.msra.mxu0 0.0
    %1210 = vmatpush.msra.mxu0 0.0
    %1211 = vmatpush.msra.mxu0 0.0
    %1212 = vmatpush.msra.mxu0 0.0
    %1213 = vmatpush.msra.mxu0 0.0
    %1214 = vmatpush.msra.mxu0 %v755
    %1215 = vmatpush.msra.mxu0 %v754
    %1216 = vmatpush.msra.mxu0 %v753
    %1217 = vmatpush.msra.mxu0 %v752
    %1218 = vmatmul.f32.gmra.mxu0 %v1200
    %v1219 = vpop.f32.mrf.mxu0
    %v1220 = vadd.f32 0.0, %v1219
    %1221 = vdwg.mxu0
    %v1223 = vrot.slane %v1220, 4
    %v1225 = vadd.f32 %v791, %v1223
    %v1226 = vxor.u32 %v1225, 2147483648
    %v1227 = vmul.f32 %v1226, 1.442695
    %v1228 = vpow.pop %v1227
    %v1229 = vadd.f32 %v1228, 1.0
    %v1230 = vrcp.pop %v1229
    %v1231 = vmul.f32 %v1229, %v1230
    %v1232 = vsub.f32 1.0, %v1231
    %v1233 = vmul.f32 %v1230, %v1232
    %v1234 = vadd.f32 %v1230, %v1233
    %vm1235 = vweird.f32 %v1229
    %vm1236 = vweird.f32 %v1230
    %vm1237 = vmor %vm1235, %vm1236
    %v1238 = vsel %vm1237, %v1230, %v1234
    %v1239 = vand.u32 2147483647, %v1229
    %vm1240 = vcmp.eq.f32.partialorder %v1239, 8.507059e+37
    %v1241 = vand.u32 %v1229, 2147483648
    %v1242 = vor.u32 1.1754944e-38, %v1241
    %v1243 = vsel %vm1240, %v1242, %v1238
    %v1244 = vmul.f32 1.0, %v1243
    %v1245 = vtanh.pop %v1225
    %v1247 = vrot.slane %v1189, 6
    %v1249 = vmul.f32 %v1244, %v1247
    %1251 = vrot.lane.b32.xlu0 %v1245, 64
    %v1252 = vpop.permute.xlu0 %1251
    %v1254 = vmul.f32 %v1244, %v1252
    %1256 = vrot.lane.b32.xlu0 %v1254, 32
    %v1257 = vpop.permute.xlu0 %1256
    %v1259 = vadd.f32 %v1249, %v1257
    %v1260 = vtanh.pop %v1259
    %1262 = vrot.lane.b32.xlu0 %v1260, 64
    %v1263 = vpop.permute.xlu0 %1262
    %v1265 = vmul.f32 %v1244, %v1263
    %v1267 = vrot.slane %v1265, 4
    %1268 = vrot.lane.b32.xlu0 %v1267, 32
    %v1269 = vpop.permute.xlu0 %1268
    %v1270 = vsel %vm195, %v1269, 0
    %1272 = vmatpush.msra.mxu0 0.0
    %1273 = vmatpush.msra.mxu0 0.0
    %1274 = vmatpush.msra.mxu0 0.0
    %1275 = vmatpush.msra.mxu0 0.0
    %1276 = vmatpush.msra.mxu0 0.0
    %1277 = vmatpush.msra.mxu0 0.0
    %1278 = vmatpush.msra.mxu0 0.0
    %1279 = vmatpush.msra.mxu0 0.0
    %1280 = vmatpush.msra.mxu0 0.0
    %1281 = vmatpush.msra.mxu0 0.0
    %1282 = vmatpush.msra.mxu0 0.0
    %1283 = vmatpush.msra.mxu0 0.0
    %1284 = vmatpush.msra.mxu0 %v755
    %1285 = vmatpush.msra.mxu0 %v754
    %1286 = vmatpush.msra.mxu0 %v753
    %1287 = vmatpush.msra.mxu0 %v752
    %1288 = vmatmul.f32.gmra.mxu0 %v1270
    %v1289 = vpop.f32.mrf.mxu0
    %v1290 = vadd.f32 0.0, %v1289
    %1291 = vdwg.mxu0
    %v1293 = vrot.slane %v1290, 2
    %v1295 = vadd.f32 %v791, %v1293
    %v1296 = vxor.u32 %v1295, 2147483648
    %v1297 = vmul.f32 %v1296, 1.442695
    %v1298 = vpow.pop %v1297
    %v1299 = vadd.f32 %v1298, 1.0
    %v1300 = vrcp.pop %v1299
    %v1301 = vmul.f32 %v1299, %v1300
    %v1302 = vsub.f32 1.0, %v1301
    %v1303 = vmul.f32 %v1300, %v1302
    %v1304 = vadd.f32 %v1300, %v1303
    %vm1305 = vweird.f32 %v1299
    %vm1306 = vweird.f32 %v1300
    %vm1307 = vmor %vm1305, %vm1306
    %v1308 = vsel %vm1307, %v1300, %v1304
    %v1309 = vand.u32 2147483647, %v1299
    %vm1310 = vcmp.eq.f32.partialorder %v1309, 8.507059e+37
    %v1311 = vand.u32 %v1299, 2147483648
    %v1312 = vor.u32 1.1754944e-38, %v1311
    %v1313 = vsel %vm1310, %v1312, %v1308
    %v1314 = vmul.f32 1.0, %v1313
    %v1315 = vtanh.pop %v1295
    %v1317 = vrot.slane %v1259, 6
    %v1319 = vmul.f32 %v1314, %v1317
    %1321 = vrot.lane.b32.xlu0 %v1315, 64
    %v1322 = vpop.permute.xlu0 %1321
    %v1324 = vmul.f32 %v1314, %v1322
    %1326 = vrot.lane.b32.xlu0 %v1324, 32
    %v1327 = vpop.permute.xlu0 %1326
    %v1329 = vadd.f32 %v1319, %v1327
    %v1330 = vtanh.pop %v1329
    %1332 = vrot.lane.b32.xlu0 %v1330, 64
    %v1333 = vpop.permute.xlu0 %1332
    %v1335 = vmul.f32 %v1314, %v1333
    %v1337 = vrot.slane %v741, 6
    %v1340 = vrot.slane %v1335, 4
    %v1342 = vsel %vm147, %v1337, %v1340
    %v1343 = vmax.f32 %v1342, 0.0
    %v1344 = vld [vmem:[%s7] sm:$0xff]
    %v1345 = vld [vmem:[%s7 + $0x8] sm:$0xff]
    %v1346 = vld [vmem:[%s7 + $0x10] sm:$0xff]
    %v1347 = vld [vmem:[%s7 + $0x18] sm:$0xff]
    %v1348 = vld [vmem:[#allocation8] sm:$0x1]
    %v1350 = vperm.slane %v1348, 0
    %1353 = vrot.lane.b32.xlu0 %v1343, 32
    %v1354 = vpop.permute.xlu0 %1353
    %v1355 = vsel %vm195, %v1354, 0
    %1357 = vmatpush.msra.mxu0 0.0
    %1358 = vmatpush.msra.mxu0 0.0
    %1359 = vmatpush.msra.mxu0 0.0
    %1360 = vmatpush.msra.mxu0 0.0
    %1361 = vmatpush.msra.mxu0 0.0
    %1362 = vmatpush.msra.mxu0 0.0
    %1363 = vmatpush.msra.mxu0 0.0
    %1364 = vmatpush.msra.mxu0 0.0
    %1365 = vmatpush.msra.mxu0 0.0
    %1366 = vmatpush.msra.mxu0 0.0
    %1367 = vmatpush.msra.mxu0 0.0
    %1368 = vmatpush.msra.mxu0 0.0
    %1369 = vmatpush.msra.mxu0 %v1347
    %1370 = vmatpush.msra.mxu0 %v1346
    %1371 = vmatpush.msra.mxu0 %v1345
    %1372 = vmatpush.msra.mxu0 %v1344
    %1373 = vmatmul.f32.gmra.mxu0 %v1355
    %v1374 = vpop.f32.mrf.mxu0
    %v1375 = vadd.f32 %v1350, %v1374
    %1376 = vdwg.mxu0
    %v1377 = vmax.f32 %v1375, 0.0
    %v1378 = vld [vmem:[%s9] sm:$0xff]
    %v1379 = vld [vmem:[%s9 + $0x8] sm:$0xff]
    %v1380 = vld [vmem:[%s9 + $0x10] sm:$0xff]
    %v1381 = vld [vmem:[%s9 + $0x18] sm:$0xff]
    %v1382 = vld [vmem:[%s9 + $0x20] sm:$0xff]
    %v1383 = vld [vmem:[%s9 + $0x28] sm:$0xff]
    %v1384 = vld [vmem:[%s9 + $0x30] sm:$0xff]
    %v1385 = vld [vmem:[%s9 + $0x38] sm:$0xff]
    %v1386 = vld [vmem:[%s9 + $0x40] sm:$0xff]
    %v1387 = vld [vmem:[%s9 + $0x48] sm:$0xff]
    %v1388 = vld [vmem:[%s9 + $0x50] sm:$0xff]
    %v1389 = vld [vmem:[%s9 + $0x58] sm:$0xff]
    %v1390 = vld [vmem:[%s9 + $0x60] sm:$0xff]
    %v1391 = vld [vmem:[%s9 + $0x68] sm:$0xff]
    %v1392 = vld [vmem:[%s9 + $0x70] sm:$0xff]
    %v1393 = vld [vmem:[%s9 + $0x78] sm:$0xff]
    %v1394 = vld [vmem:[#allocation10] sm:$0x1]
    %v1396 = vperm.slane %v1394, 0
    %1398 = vmatpush.msra.mxu0 %v1393
    %1399 = vmatpush.msra.mxu0 %v1392
    %1400 = vmatpush.msra.mxu0 %v1391
    %1401 = vmatpush.msra.mxu0 %v1390
    %1402 = vmatpush.msra.mxu0 %v1389
    %1403 = vmatpush.msra.mxu0 %v1388
    %1404 = vmatpush.msra.mxu0 %v1387
    %1405 = vmatpush.msra.mxu0 %v1386
    %1406 = vmatpush.msra.mxu0 %v1385
    %1407 = vmatpush.msra.mxu0 %v1384
    %1408 = vmatpush.msra.mxu0 %v1383
    %1409 = vmatpush.msra.mxu0 %v1382
    %1410 = vmatpush.msra.mxu0 %v1381
    %1411 = vmatpush.msra.mxu0 %v1380
    %1412 = vmatpush.msra.mxu0 %v1379
    %1413 = vmatpush.msra.mxu0 %v1378
    %1414 = vmatmul.f32.gmra.mxu0 %v1377
    %v1415 = vpop.f32.mrf.mxu0
    %v1416 = vadd.f32 %v1396, %v1415
    %1417 = vdwg.mxu0
    %vm1418 = vcmask 35840
    %1419 = vst.msk [vmem:[#allocation11] sm:$0xf] %vm1418, %v1416
    // Predicated region
    $region66: #{lstm_forward.1} parent=1 // pred_check
      _
    $region67: #{lstm_forward.1} parent=1 // pred_check_branch
      %1421 = sbr.rel (0) target = $region69
    $region68: #{lstm_forward.1} parent=1 // pred_region
      %1423 = vsyncadd [#allocation4], 0
      %s1425 = sshll.u32 [#allocation11], 4
      %s1426 = int_to_ptr.vmem [resolvable:$true] %s1425
      %s1427 = sshll.u32 %s11, 4
      %s1428 = int_to_ptr.hbm [resolvable:$true] %s1427
      %1430 = dma.vmem_to_hbm [thread:$0]  %s1426, 64, %s1428, [#allocation4]
    $region69: #{lstm_forward.1} parent=1 // pred_fallthru
      _
    // Predicated region
    $region70: #{lstm_forward.1} parent=1 // pred_check
      _
    $region71: #{lstm_forward.1} parent=1 // pred_check_branch
      %1432 = sbr.rel (0) target = $region73
    $region72: #{lstm_forward.1} parent=1 // pred_region
      %1434 = dma.done [#allocation4], 64
    $region73: #{lstm_forward.1} parent=1 // pred_fallthru
      _
    %1435 = vsyncpa [#allocation3], 1
    %1436 = vsyncpa [#allocation6], 1
    %1437 = vsyncpa [#allocation9], 1
    %1438 = vsyncpa [#allocation4], 1

</llo_original>
